<compile_context>
chip_gen: v6e
topology: v6e:2x2x1
jax: 0.10.0
libtpu: 0.0.40
codegen_flags: <defaults>
</compile_context>

<pallas_src>
import math

import jax
import jax.numpy as jnp
from jax.experimental import pallas as pl
from jax.experimental.pallas import tpu as pltpu


def lstm_net_forward(x, params):
    """x: (B, T, D_in) batch_first, like the PyTorch module. Returns (B, n_class)."""
    B, T, D_in = x.shape
    H = params["wrec"].shape[0] // 2
    n_class = params["wlin"].shape[0]
    H2, H3, H4, H6, H8 = 2 * H, 3 * H, 4 * H, 6 * H, 8 * H

    # Time-major, flattened: row (t*B + b) is timestep t of batch element b.
    # Enables one batched input-projection matmul and static per-stage row slices.
    x_flat = jnp.transpose(x, (1, 0, 2)).reshape(T * B, D_in)

    def kernel(x_ref, wx_ref, bc_ref, wrec_ref, wlast_ref, b1_ref,
               wlin_ref, blin_ref, out_ref):
        # ---- Layer-0 input projection for all T timesteps: ONE MXU matmul. ----
        # Row t*B+b of z_all holds, in the combined [i0 i1 f0 f1 o0 o1 g0 g1]
        # layout: layer-0 columns = x_tb @ wih0 + b0, layer-1 columns = b1.
        z_all = (jnp.dot(x_ref[...].astype(jnp.float32), wx_ref[...],
                         preferred_element_type=jnp.float32)
                 + bc_ref[...])                                     # (T*B, 8H)

        wrec = wrec_ref[...]                                        # (2H, 8H)

        def combined_cell(z, c):
            # z: (B, 8H) pre-activations for BOTH layers, [i(2H)|f(2H)|o(2H)|g(2H)].
            # c: (B, 2H) combined cell state [c_layer0 | c_layer1].
            s = jax.nn.sigmoid(z[:, :H6])         # 1 EUP launch: i,f,o of both layers
            g = jnp.tanh(z[:, H6:])               # 1 EUP launch: g of both layers
            i = s[:, 0:H2]
            f = s[:, H2:H4]
            o = s[:, H4:H6]
            c_new = f * c + i * g
            h_new = o * jnp.tanh(c_new)           # 1 EUP launch: both layers
            return h_new, c_new

        # ---- Stage 0: layer-0 step 0 (zero initial state, so no recurrent matmul).
        # The layer-1 half is a phantom step: forcing its i-gate pre-activation to
        # -1e9 makes sigmoid()==0 exactly, so that half stays at h==c==0 (= init).
        col = jax.lax.broadcasted_iota(jnp.int32, (B, H8), 1)
        z0 = jnp.where((col >= H) & (col < H2), jnp.float32(-1e9), z_all[0:B, :])
        h, c = combined_cell(z0, jnp.zeros((B, H2), jnp.float32))    # h = [h0_0 | 0]

        # ---- Stages 1..T-1: layer-0 step t fused with layer-1 step t-1.
        # One (B,2H)@(2H,8H) MXU matmul per stage; T+1 serial cells total vs 2T.
        for t in range(1, T):                                        # fully unrolled
            z = z_all[t * B:(t + 1) * B, :] + jnp.dot(
                h, wrec, preferred_element_type=jnp.float32)
            h, c = combined_cell(z, c)
        # Now h = [h0_{T-1} | h1_{T-2}],  c = [c0_{T-1} | c1_{T-2}].

        # ---- Final stage: layer-1 step T-1 only (columns [i f o g], width 4H). ----
        z = jnp.dot(h, wlast_ref[...],
                    preferred_element_type=jnp.float32) + b1_ref[...]   # (B, 4H)
        s = jax.nn.sigmoid(z[:, :H3])
        g = jnp.tanh(z[:, H3:])
        c1 = s[:, H:H2] * c[:, H:H2] + s[:, 0:H] * g
        h1 = s[:, H2:H3] * jnp.tanh(c1)                                 # (B, H)

        # ---- Head: h1 @ W_lin^T + b as VPU multiply + lane reduce (n_class tiny).
        out = (jnp.sum(h1[:, None, :] * wlin_ref[...][None, :, :], axis=-1)
               + blin_ref[...])
        out_ref[...] = out.astype(out_ref.dtype)

    args = (x_flat, params["wx"], params["bc"], params["wrec"],
            params["wlast"], params["b1"], params["wlin"], params["blin"])

    vmem = pl.BlockSpec(memory_space=pltpu.MemorySpace.VMEM)
    return pl.pallas_call(
        kernel,
        out_shape=jax.ShapeDtypeStruct((B, n_class), x.dtype),
        in_specs=[vmem] * len(args),
        out_specs=vmem,
    )(*args)


# ----------------------------- parameter handling -----------------------------

def init_raw_params(key, in_dim=2, hidden_dim=32, n_class=1):
    """Raw PyTorch-shaped parameters, U(-1/sqrt(H), 1/sqrt(H)) like nn.LSTM/nn.Linear."""
    bound = 1.0 / math.sqrt(hidden_dim)
    ks = jax.random.split(key, 10)

    def u(k, shape):
        return jax.random.uniform(k, shape, jnp.float32, -bound, bound)

    return {
        "w_ih0": u(ks[0], (4 * hidden_dim, in_dim)),
        "w_hh0": u(ks[1], (4 * hidden_dim, hidden_dim)),
        "b_ih0": u(ks[2], (4 * hidden_dim,)),
        "b_hh0": u(ks[3], (4 * hidden_dim,)),
        "w_ih1": u(ks[4], (4 * hidden_dim, hidden_dim)),
        "w_hh1": u(ks[5], (4 * hidden_dim, hidden_dim)),
        "b_ih1": u(ks[6], (4 * hidden_dim,)),
        "b_hh1": u(ks[7], (4 * hidden_dim,)),
        "w_lin": u(ks[8], (n_class, hidden_dim)),
        "b_lin": u(ks[9], (n_class,)),
    }


def _gates_T(w):
    """(4H, K) PyTorch gate-stacked weight -> (i, f, g, o) blocks, each (K, H)."""
    H = w.shape[0] // 4
    return w[0:H].T, w[H:2 * H].T, w[2 * H:3 * H].T, w[3 * H:4 * H].T


def _gates_b(b):
    H = b.shape[0] // 4
    return b[0:H], b[H:2 * H], b[2 * H:3 * H], b[3 * H:4 * H]


def pack_params(raw):
    """Repack PyTorch weights for the fused two-layer combined-state cell.

    Combined column layout (width 8H, blocks of H): [i0, i1, f0, f1, o0, o1, g0, g1]
    (0 = layer 0, 1 = layer 1).  Combined state layout (2H): [layer0 | layer1].
    """
    H = raw["w_hh0"].shape[1]
    D_in = raw["w_ih0"].shape[1]

    i0x, f0x, g0x, o0x = _gates_T(raw["w_ih0"])            # (D_in, H) each
    i0h, f0h, g0h, o0h = _gates_T(raw["w_hh0"])            # (H, H)
    i1x, f1x, g1x, o1x = _gates_T(raw["w_ih1"])            # (H, H)
    i1h, f1h, g1h, o1h = _gates_T(raw["w_hh1"])            # (H, H)

    b0i, b0f, b0g, b0o = [a + b for a, b in
                          zip(_gates_b(raw["b_ih0"]), _gates_b(raw["b_hh0"]))]
    b1i, b1f, b1g, b1o = [a + b for a, b in
                          zip(_gates_b(raw["b_ih1"]), _gates_b(raw["b_hh1"]))]

    Zx = jnp.zeros((D_in, H), jnp.float32)
    ZH = jnp.zeros((H, H), jnp.float32)

    # Batched input projection: layer-0 columns filled, layer-1 columns zero.
    wx = jnp.concatenate([i0x, Zx, f0x, Zx, o0x, Zx, g0x, Zx], axis=1)   # (D_in, 8H)
    # Fused biases in the combined layout (layer-1 columns carry b1).
    bc = jnp.concatenate([b0i, b1i, b0f, b1f, b0o, b1o, b0g, b1g]).reshape(1, 8 * H)

    # Recurrent weight acting on the combined state [h0 | h1]:
    top = jnp.concatenate([i0h, i1x, f0h, f1x, o0h, o1x, g0h, g1x], axis=1)  # h0 rows
    bot = jnp.concatenate([ZH, i1h, ZH, f1h, ZH, o1h, ZH, g1h], axis=1)      # h1 rows
    wrec = jnp.concatenate([top, bot], axis=0)                               # (2H, 8H)

    # Final layer-1-only step: [h0_last | h1_prev] @ wlast + b1, columns [i f o g].
    wlast = jnp.concatenate(
        [jnp.concatenate([i1x, f1x, o1x, g1x], axis=1),
         jnp.concatenate([i1h, f1h, o1h, g1h], axis=1)], axis=0)             # (2H, 4H)
    b1v = jnp.concatenate([b1i, b1f, b1o, b1g]).reshape(1, 4 * H)

    return {
        "wx": wx, "bc": bc, "wrec": wrec, "wlast": wlast, "b1": b1v,
        "wlin": raw["w_lin"],                                      # (n_class, H)
        "blin": raw["b_lin"].reshape(1, -1),                       # (1, n_class)
    }


# ------------------- pure-JAX reference (PyTorch semantics) -------------------

def reference_forward(x, raw):
    H = raw["w_hh0"].shape[1]

    def cell(x_t, h, c, w_ih, w_hh, b_ih, b_hh):
        z = x_t @ w_ih.T + h @ w_hh.T + b_ih + b_hh                # gate order [i,f,g,o]
        i = jax.nn.sigmoid(z[:, 0 * H:1 * H])
        f = jax.nn.sigmoid(z[:, 1 * H:2 * H])
        g = jnp.tanh(z[:, 2 * H:3 * H])
        o = jax.nn.sigmoid(z[:, 3 * H:4 * H])
        c = f * c + i * g
        h = o * jnp.tanh(c)
        return h, c

    B, T, _ = x.shape
    h0 = c0 = h1 = c1 = jnp.zeros((B, H), jnp.float32)
    for t in range(T):
        h0, c0 = cell(x[:, t, :], h0, c0,
                      raw["w_ih0"], raw["w_hh0"], raw["b_ih0"], raw["b_hh0"])
        h1, c1 = cell(h0, h1, c1,
                      raw["w_ih1"], raw["w_hh1"], raw["b_ih1"], raw["b_hh1"])
    return h1 @ raw["w_lin"].T + raw["b_lin"]


if __name__ == "__main__":
    B, T, D_in, H, n_class = 2, 8, 2, 32, 1

    key = jax.random.PRNGKey(0)
    k_param, k_x = jax.random.split(key)
    raw = init_raw_params(k_param, in_dim=D_in, hidden_dim=H, n_class=n_class)
    params = pack_params(raw)
    x = jax.random.normal(k_x, (B, T, D_in), jnp.float32)

    out = jax.block_until_ready(lstm_net_forward(x, params))
    ref = reference_forward(x, raw)

    assert out.shape == (B, n_class), out.shape
    assert jnp.allclose(out, ref, atol=2e-3, rtol=2e-3), (out, ref)

    print("KERNEL_OK")
</pallas_src>

<mosaic_0001>
module attributes {stable_mosaic.version = 11 : i64} {
  func.func @kernel(%arg0: memref<16x2xf32, #tpu.memory_space<vmem>>, %arg1: memref<2x256xf32, #tpu.memory_space<vmem>>, %arg2: memref<1x256xf32, #tpu.memory_space<vmem>>, %arg3: memref<64x256xf32, #tpu.memory_space<vmem>>, %arg4: memref<64x128xf32, #tpu.memory_space<vmem>>, %arg5: memref<1x128xf32, #tpu.memory_space<vmem>>, %arg6: memref<1x32xf32, #tpu.memory_space<vmem>>, %arg7: memref<1x1xf32, #tpu.memory_space<vmem>>, %arg8: memref<2x1xf32, #tpu.memory_space<vmem>>) attributes {dimension_semantics = [], scalar_prefetch = 0 : i64, scratch_operands = 0 : i64, tpu.core_type = #tpu.core_type<tc>} {
    %c0 = arith.constant 0 : index
    %c0_0 = arith.constant 0 : index
    %0 = vector.load %arg0[%c0, %c0_0] : memref<16x2xf32, #tpu.memory_space<vmem>>, vector<16x2xf32>
    %c0_1 = arith.constant 0 : index
    %c0_2 = arith.constant 0 : index
    %1 = vector.load %arg1[%c0_1, %c0_2] : memref<2x256xf32, #tpu.memory_space<vmem>>, vector<2x256xf32>
    %cst = arith.constant dense<0.000000e+00> : vector<16x256xf32>
    %2 = tpu.matmul %0, %1, %cst {dimension_numbers = #tpu.dot_dimension_numbers<[1], [0], [0], [1], [0, 0, 1, 1], [], []>} : vector<16x2xf32>, vector<2x256xf32>, vector<16x256xf32> -> vector<16x256xf32>
    %c0_3 = arith.constant 0 : index
    %c0_4 = arith.constant 0 : index
    %3 = vector.load %arg2[%c0_3, %c0_4] : memref<1x256xf32, #tpu.memory_space<vmem>>, vector<1x256xf32>
    %4 = vector.broadcast %3 : vector<1x256xf32> to vector<16x256xf32>
    %5 = arith.addf %2, %4 : vector<16x256xf32>
    %c0_5 = arith.constant 0 : index
    %c0_6 = arith.constant 0 : index
    %6 = vector.load %arg3[%c0_5, %c0_6] : memref<64x256xf32, #tpu.memory_space<vmem>>, vector<64x256xf32>
    %7 = tpu.iota {dimensions = array<i32: 1>} : vector<2x256xi32>
    %c32_i32 = arith.constant 32 : i32
    %8 = vector.broadcast %c32_i32 : i32 to vector<2x256xi32>
    %9 = arith.cmpi sge, %7, %8 : vector<2x256xi32>
    %c64_i32 = arith.constant 64 : i32
    %10 = vector.broadcast %c64_i32 : i32 to vector<2x256xi32>
    %11 = arith.cmpi slt, %7, %10 : vector<2x256xi32>
    %12 = arith.andi %9, %11 : vector<2x256xi1>
    %13 = vector.extract_strided_slice %5 {offsets = [0, 0], sizes = [2, 256], strides = [1, 1]} : vector<16x256xf32> to vector<2x256xf32>
    %cst_7 = arith.constant -1.000000e+09 : f32
    %14 = vector.broadcast %cst_7 : f32 to vector<2x256xf32>
    %15 = arith.select %12, %14, %13 : vector<2x256xi1>, vector<2x256xf32>
    %cst_8 = arith.constant 0.000000e+00 : f32
    %16 = vector.broadcast %cst_8 : f32 to vector<2x64xf32>
    %17 = vector.extract_strided_slice %15 {offsets = [0, 0], sizes = [2, 192], strides = [1, 1]} : vector<2x256xf32> to vector<2x192xf32>
    %18 = arith.negf %17 : vector<2x192xf32>
    %19 = math.exp %18 : vector<2x192xf32>
    %cst_9 = arith.constant 1.000000e+00 : f32
    %20 = vector.broadcast %cst_9 : f32 to vector<2x192xf32>
    %21 = arith.addf %20, %19 : vector<2x192xf32>
    %22 = arith.divf %20, %21 : vector<2x192xf32>
    %23 = vector.extract_strided_slice %15 {offsets = [0, 192], sizes = [2, 64], strides = [1, 1]} : vector<2x256xf32> to vector<2x64xf32>
    %24 = math.tanh %23 : vector<2x64xf32>
    %25 = vector.extract_strided_slice %22 {offsets = [0, 0], sizes = [2, 64], strides = [1, 1]} : vector<2x192xf32> to vector<2x64xf32>
    %26 = vector.extract_strided_slice %22 {offsets = [0, 64], sizes = [2, 64], strides = [1, 1]} : vector<2x192xf32> to vector<2x64xf32>
    %27 = vector.extract_strided_slice %22 {offsets = [0, 128], sizes = [2, 64], strides = [1, 1]} : vector<2x192xf32> to vector<2x64xf32>
    %28 = arith.mulf %26, %16 : vector<2x64xf32>
    %29 = arith.mulf %25, %24 : vector<2x64xf32>
    %30 = arith.addf %28, %29 : vector<2x64xf32>
    %31 = math.tanh %30 : vector<2x64xf32>
    %32 = arith.mulf %27, %31 : vector<2x64xf32>
    %33 = vector.extract_strided_slice %5 {offsets = [2, 0], sizes = [2, 256], strides = [1, 1]} : vector<16x256xf32> to vector<2x256xf32>
    %cst_10 = arith.constant dense<0.000000e+00> : vector<2x256xf32>
    %34 = tpu.matmul %32, %6, %cst_10 {dimension_numbers = #tpu.dot_dimension_numbers<[1], [0], [0], [1], [0, 0, 1, 1], [], []>} : vector<2x64xf32>, vector<64x256xf32>, vector<2x256xf32> -> vector<2x256xf32>
    %35 = arith.addf %33, %34 : vector<2x256xf32>
    %36 = vector.extract_strided_slice %35 {offsets = [0, 0], sizes = [2, 192], strides = [1, 1]} : vector<2x256xf32> to vector<2x192xf32>
    %37 = arith.negf %36 : vector<2x192xf32>
    %38 = math.exp %37 : vector<2x192xf32>
    %cst_11 = arith.constant 1.000000e+00 : f32
    %39 = vector.broadcast %cst_11 : f32 to vector<2x192xf32>
    %40 = arith.addf %39, %38 : vector<2x192xf32>
    %41 = arith.divf %39, %40 : vector<2x192xf32>
    %42 = vector.extract_strided_slice %35 {offsets = [0, 192], sizes = [2, 64], strides = [1, 1]} : vector<2x256xf32> to vector<2x64xf32>
    %43 = math.tanh %42 : vector<2x64xf32>
    %44 = vector.extract_strided_slice %41 {offsets = [0, 0], sizes = [2, 64], strides = [1, 1]} : vector<2x192xf32> to vector<2x64xf32>
    %45 = vector.extract_strided_slice %41 {offsets = [0, 64], sizes = [2, 64], strides = [1, 1]} : vector<2x192xf32> to vector<2x64xf32>
    %46 = vector.extract_strided_slice %41 {offsets = [0, 128], sizes = [2, 64], strides = [1, 1]} : vector<2x192xf32> to vector<2x64xf32>
    %47 = arith.mulf %45, %30 : vector<2x64xf32>
    %48 = arith.mulf %44, %43 : vector<2x64xf32>
    %49 = arith.addf %47, %48 : vector<2x64xf32>
    %50 = math.tanh %49 : vector<2x64xf32>
    %51 = arith.mulf %46, %50 : vector<2x64xf32>
    %52 = vector.extract_strided_slice %5 {offsets = [4, 0], sizes = [2, 256], strides = [1, 1]} : vector<16x256xf32> to vector<2x256xf32>
    %cst_12 = arith.constant dense<0.000000e+00> : vector<2x256xf32>
    %53 = tpu.matmul %51, %6, %cst_12 {dimension_numbers = #tpu.dot_dimension_numbers<[1], [0], [0], [1], [0, 0, 1, 1], [], []>} : vector<2x64xf32>, vector<64x256xf32>, vector<2x256xf32> -> vector<2x256xf32>
    %54 = arith.addf %52, %53 : vector<2x256xf32>
    %55 = vector.extract_strided_slice %54 {offsets = [0, 0], sizes = [2, 192], strides = [1, 1]} : vector<2x256xf32> to vector<2x192xf32>
    %56 = arith.negf %55 : vector<2x192xf32>
    %57 = math.exp %56 : vector<2x192xf32>
    %cst_13 = arith.constant 1.000000e+00 : f32
    %58 = vector.broadcast %cst_13 : f32 to vector<2x192xf32>
    %59 = arith.addf %58, %57 : vector<2x192xf32>
    %60 = arith.divf %58, %59 : vector<2x192xf32>
    %61 = vector.extract_strided_slice %54 {offsets = [0, 192], sizes = [2, 64], strides = [1, 1]} : vector<2x256xf32> to vector<2x64xf32>
    %62 = math.tanh %61 : vector<2x64xf32>
    %63 = vector.extract_strided_slice %60 {offsets = [0, 0], sizes = [2, 64], strides = [1, 1]} : vector<2x192xf32> to vector<2x64xf32>
    %64 = vector.extract_strided_slice %60 {offsets = [0, 64], sizes = [2, 64], strides = [1, 1]} : vector<2x192xf32> to vector<2x64xf32>
    %65 = vector.extract_strided_slice %60 {offsets = [0, 128], sizes = [2, 64], strides = [1, 1]} : vector<2x192xf32> to vector<2x64xf32>
    %66 = arith.mulf %64, %49 : vector<2x64xf32>
    %67 = arith.mulf %63, %62 : vector<2x64xf32>
    %68 = arith.addf %66, %67 : vector<2x64xf32>
    %69 = math.tanh %68 : vector<2x64xf32>
    %70 = arith.mulf %65, %69 : vector<2x64xf32>
    %71 = vector.extract_strided_slice %5 {offsets = [6, 0], sizes = [2, 256], strides = [1, 1]} : vector<16x256xf32> to vector<2x256xf32>
    %cst_14 = arith.constant dense<0.000000e+00> : vector<2x256xf32>
    %72 = tpu.matmul %70, %6, %cst_14 {dimension_numbers = #tpu.dot_dimension_numbers<[1], [0], [0], [1], [0, 0, 1, 1], [], []>} : vector<2x64xf32>, vector<64x256xf32>, vector<2x256xf32> -> vector<2x256xf32>
    %73 = arith.addf %71, %72 : vector<2x256xf32>
    %74 = vector.extract_strided_slice %73 {offsets = [0, 0], sizes = [2, 192], strides = [1, 1]} : vector<2x256xf32> to vector<2x192xf32>
    %75 = arith.negf %74 : vector<2x192xf32>
    %76 = math.exp %75 : vector<2x192xf32>
    %cst_15 = arith.constant 1.000000e+00 : f32
    %77 = vector.broadcast %cst_15 : f32 to vector<2x192xf32>
    %78 = arith.addf %77, %76 : vector<2x192xf32>
    %79 = arith.divf %77, %78 : vector<2x192xf32>
    %80 = vector.extract_strided_slice %73 {offsets = [0, 192], sizes = [2, 64], strides = [1, 1]} : vector<2x256xf32> to vector<2x64xf32>
    %81 = math.tanh %80 : vector<2x64xf32>
    %82 = vector.extract_strided_slice %79 {offsets = [0, 0], sizes = [2, 64], strides = [1, 1]} : vector<2x192xf32> to vector<2x64xf32>
    %83 = vector.extract_strided_slice %79 {offsets = [0, 64], sizes = [2, 64], strides = [1, 1]} : vector<2x192xf32> to vector<2x64xf32>
    %84 = vector.extract_strided_slice %79 {offsets = [0, 128], sizes = [2, 64], strides = [1, 1]} : vector<2x192xf32> to vector<2x64xf32>
    %85 = arith.mulf %83, %68 : vector<2x64xf32>
    %86 = arith.mulf %82, %81 : vector<2x64xf32>
    %87 = arith.addf %85, %86 : vector<2x64xf32>
    %88 = math.tanh %87 : vector<2x64xf32>
    %89 = arith.mulf %84, %88 : vector<2x64xf32>
    %90 = vector.extract_strided_slice %5 {offsets = [8, 0], sizes = [2, 256], strides = [1, 1]} : vector<16x256xf32> to vector<2x256xf32>
    %cst_16 = arith.constant dense<0.000000e+00> : vector<2x256xf32>
    %91 = tpu.matmul %89, %6, %cst_16 {dimension_numbers = #tpu.dot_dimension_numbers<[1], [0], [0], [1], [0, 0, 1, 1], [], []>} : vector<2x64xf32>, vector<64x256xf32>, vector<2x256xf32> -> vector<2x256xf32>
    %92 = arith.addf %90, %91 : vector<2x256xf32>
    %93 = vector.extract_strided_slice %92 {offsets = [0, 0], sizes = [2, 192], strides = [1, 1]} : vector<2x256xf32> to vector<2x192xf32>
    %94 = arith.negf %93 : vector<2x192xf32>
    %95 = math.exp %94 : vector<2x192xf32>
    %cst_17 = arith.constant 1.000000e+00 : f32
    %96 = vector.broadcast %cst_17 : f32 to vector<2x192xf32>
    %97 = arith.addf %96, %95 : vector<2x192xf32>
    %98 = arith.divf %96, %97 : vector<2x192xf32>
    %99 = vector.extract_strided_slice %92 {offsets = [0, 192], sizes = [2, 64], strides = [1, 1]} : vector<2x256xf32> to vector<2x64xf32>
    %100 = math.tanh %99 : vector<2x64xf32>
    %101 = vector.extract_strided_slice %98 {offsets = [0, 0], sizes = [2, 64], strides = [1, 1]} : vector<2x192xf32> to vector<2x64xf32>
    %102 = vector.extract_strided_slice %98 {offsets = [0, 64], sizes = [2, 64], strides = [1, 1]} : vector<2x192xf32> to vector<2x64xf32>
    %103 = vector.extract_strided_slice %98 {offsets = [0, 128], sizes = [2, 64], strides = [1, 1]} : vector<2x192xf32> to vector<2x64xf32>
    %104 = arith.mulf %102, %87 : vector<2x64xf32>
    %105 = arith.mulf %101, %100 : vector<2x64xf32>
    %106 = arith.addf %104, %105 : vector<2x64xf32>
    %107 = math.tanh %106 : vector<2x64xf32>
    %108 = arith.mulf %103, %107 : vector<2x64xf32>
    %109 = vector.extract_strided_slice %5 {offsets = [10, 0], sizes = [2, 256], strides = [1, 1]} : vector<16x256xf32> to vector<2x256xf32>
    %cst_18 = arith.constant dense<0.000000e+00> : vector<2x256xf32>
    %110 = tpu.matmul %108, %6, %cst_18 {dimension_numbers = #tpu.dot_dimension_numbers<[1], [0], [0], [1], [0, 0, 1, 1], [], []>} : vector<2x64xf32>, vector<64x256xf32>, vector<2x256xf32> -> vector<2x256xf32>
    %111 = arith.addf %109, %110 : vector<2x256xf32>
    %112 = vector.extract_strided_slice %111 {offsets = [0, 0], sizes = [2, 192], strides = [1, 1]} : vector<2x256xf32> to vector<2x192xf32>
    %113 = arith.negf %112 : vector<2x192xf32>
    %114 = math.exp %113 : vector<2x192xf32>
    %cst_19 = arith.constant 1.000000e+00 : f32
    %115 = vector.broadcast %cst_19 : f32 to vector<2x192xf32>
    %116 = arith.addf %115, %114 : vector<2x192xf32>
    %117 = arith.divf %115, %116 : vector<2x192xf32>
    %118 = vector.extract_strided_slice %111 {offsets = [0, 192], sizes = [2, 64], strides = [1, 1]} : vector<2x256xf32> to vector<2x64xf32>
    %119 = math.tanh %118 : vector<2x64xf32>
    %120 = vector.extract_strided_slice %117 {offsets = [0, 0], sizes = [2, 64], strides = [1, 1]} : vector<2x192xf32> to vector<2x64xf32>
    %121 = vector.extract_strided_slice %117 {offsets = [0, 64], sizes = [2, 64], strides = [1, 1]} : vector<2x192xf32> to vector<2x64xf32>
    %122 = vector.extract_strided_slice %117 {offsets = [0, 128], sizes = [2, 64], strides = [1, 1]} : vector<2x192xf32> to vector<2x64xf32>
    %123 = arith.mulf %121, %106 : vector<2x64xf32>
    %124 = arith.mulf %120, %119 : vector<2x64xf32>
    %125 = arith.addf %123, %124 : vector<2x64xf32>
    %126 = math.tanh %125 : vector<2x64xf32>
    %127 = arith.mulf %122, %126 : vector<2x64xf32>
    %128 = vector.extract_strided_slice %5 {offsets = [12, 0], sizes = [2, 256], strides = [1, 1]} : vector<16x256xf32> to vector<2x256xf32>
    %cst_20 = arith.constant dense<0.000000e+00> : vector<2x256xf32>
    %129 = tpu.matmul %127, %6, %cst_20 {dimension_numbers = #tpu.dot_dimension_numbers<[1], [0], [0], [1], [0, 0, 1, 1], [], []>} : vector<2x64xf32>, vector<64x256xf32>, vector<2x256xf32> -> vector<2x256xf32>
    %130 = arith.addf %128, %129 : vector<2x256xf32>
    %131 = vector.extract_strided_slice %130 {offsets = [0, 0], sizes = [2, 192], strides = [1, 1]} : vector<2x256xf32> to vector<2x192xf32>
    %132 = arith.negf %131 : vector<2x192xf32>
    %133 = math.exp %132 : vector<2x192xf32>
    %cst_21 = arith.constant 1.000000e+00 : f32
    %134 = vector.broadcast %cst_21 : f32 to vector<2x192xf32>
    %135 = arith.addf %134, %133 : vector<2x192xf32>
    %136 = arith.divf %134, %135 : vector<2x192xf32>
    %137 = vector.extract_strided_slice %130 {offsets = [0, 192], sizes = [2, 64], strides = [1, 1]} : vector<2x256xf32> to vector<2x64xf32>
    %138 = math.tanh %137 : vector<2x64xf32>
    %139 = vector.extract_strided_slice %136 {offsets = [0, 0], sizes = [2, 64], strides = [1, 1]} : vector<2x192xf32> to vector<2x64xf32>
    %140 = vector.extract_strided_slice %136 {offsets = [0, 64], sizes = [2, 64], strides = [1, 1]} : vector<2x192xf32> to vector<2x64xf32>
    %141 = vector.extract_strided_slice %136 {offsets = [0, 128], sizes = [2, 64], strides = [1, 1]} : vector<2x192xf32> to vector<2x64xf32>
    %142 = arith.mulf %140, %125 : vector<2x64xf32>
    %143 = arith.mulf %139, %138 : vector<2x64xf32>
    %144 = arith.addf %142, %143 : vector<2x64xf32>
    %145 = math.tanh %144 : vector<2x64xf32>
    %146 = arith.mulf %141, %145 : vector<2x64xf32>
    %147 = vector.extract_strided_slice %5 {offsets = [14, 0], sizes = [2, 256], strides = [1, 1]} : vector<16x256xf32> to vector<2x256xf32>
    %cst_22 = arith.constant dense<0.000000e+00> : vector<2x256xf32>
    %148 = tpu.matmul %146, %6, %cst_22 {dimension_numbers = #tpu.dot_dimension_numbers<[1], [0], [0], [1], [0, 0, 1, 1], [], []>} : vector<2x64xf32>, vector<64x256xf32>, vector<2x256xf32> -> vector<2x256xf32>
    %149 = arith.addf %147, %148 : vector<2x256xf32>
    %150 = vector.extract_strided_slice %149 {offsets = [0, 0], sizes = [2, 192], strides = [1, 1]} : vector<2x256xf32> to vector<2x192xf32>
    %151 = arith.negf %150 : vector<2x192xf32>
    %152 = math.exp %151 : vector<2x192xf32>
    %cst_23 = arith.constant 1.000000e+00 : f32
    %153 = vector.broadcast %cst_23 : f32 to vector<2x192xf32>
    %154 = arith.addf %153, %152 : vector<2x192xf32>
    %155 = arith.divf %153, %154 : vector<2x192xf32>
    %156 = vector.extract_strided_slice %149 {offsets = [0, 192], sizes = [2, 64], strides = [1, 1]} : vector<2x256xf32> to vector<2x64xf32>
    %157 = math.tanh %156 : vector<2x64xf32>
    %158 = vector.extract_strided_slice %155 {offsets = [0, 0], sizes = [2, 64], strides = [1, 1]} : vector<2x192xf32> to vector<2x64xf32>
    %159 = vector.extract_strided_slice %155 {offsets = [0, 64], sizes = [2, 64], strides = [1, 1]} : vector<2x192xf32> to vector<2x64xf32>
    %160 = vector.extract_strided_slice %155 {offsets = [0, 128], sizes = [2, 64], strides = [1, 1]} : vector<2x192xf32> to vector<2x64xf32>
    %161 = arith.mulf %159, %144 : vector<2x64xf32>
    %162 = arith.mulf %158, %157 : vector<2x64xf32>
    %163 = arith.addf %161, %162 : vector<2x64xf32>
    %164 = math.tanh %163 : vector<2x64xf32>
    %165 = arith.mulf %160, %164 : vector<2x64xf32>
    %c0_24 = arith.constant 0 : index
    %c0_25 = arith.constant 0 : index
    %166 = vector.load %arg4[%c0_24, %c0_25] : memref<64x128xf32, #tpu.memory_space<vmem>>, vector<64x128xf32>
    %cst_26 = arith.constant dense<0.000000e+00> : vector<2x128xf32>
    %167 = tpu.matmul %165, %166, %cst_26 {dimension_numbers = #tpu.dot_dimension_numbers<[1], [0], [0], [1], [0, 0, 1, 1], [], []>} : vector<2x64xf32>, vector<64x128xf32>, vector<2x128xf32> -> vector<2x128xf32>
    %c0_27 = arith.constant 0 : index
    %c0_28 = arith.constant 0 : index
    %168 = vector.load %arg5[%c0_27, %c0_28] : memref<1x128xf32, #tpu.memory_space<vmem>>, vector<1x128xf32>
    %169 = vector.broadcast %168 : vector<1x128xf32> to vector<2x128xf32>
    %170 = arith.addf %167, %169 : vector<2x128xf32>
    %171 = vector.extract_strided_slice %170 {offsets = [0, 0], sizes = [2, 96], strides = [1, 1]} : vector<2x128xf32> to vector<2x96xf32>
    %172 = arith.negf %171 : vector<2x96xf32>
    %173 = math.exp %172 : vector<2x96xf32>
    %cst_29 = arith.constant 1.000000e+00 : f32
    %174 = vector.broadcast %cst_29 : f32 to vector<2x96xf32>
    %175 = arith.addf %174, %173 : vector<2x96xf32>
    %176 = arith.divf %174, %175 : vector<2x96xf32>
    %177 = vector.extract_strided_slice %170 {offsets = [0, 96], sizes = [2, 32], strides = [1, 1]} : vector<2x128xf32> to vector<2x32xf32>
    %178 = math.tanh %177 : vector<2x32xf32>
    %179 = vector.extract_strided_slice %176 {offsets = [0, 32], sizes = [2, 32], strides = [1, 1]} : vector<2x96xf32> to vector<2x32xf32>
    %180 = vector.extract_strided_slice %163 {offsets = [0, 32], sizes = [2, 32], strides = [1, 1]} : vector<2x64xf32> to vector<2x32xf32>
    %181 = arith.mulf %179, %180 : vector<2x32xf32>
    %182 = vector.extract_strided_slice %176 {offsets = [0, 0], sizes = [2, 32], strides = [1, 1]} : vector<2x96xf32> to vector<2x32xf32>
    %183 = arith.mulf %182, %178 : vector<2x32xf32>
    %184 = arith.addf %181, %183 : vector<2x32xf32>
    %185 = vector.extract_strided_slice %176 {offsets = [0, 64], sizes = [2, 32], strides = [1, 1]} : vector<2x96xf32> to vector<2x32xf32>
    %186 = math.tanh %184 : vector<2x32xf32>
    %187 = arith.mulf %185, %186 : vector<2x32xf32>
    %188 = vector.shape_cast %187 : vector<2x32xf32> to vector<2x1x32xf32>
    %c0_30 = arith.constant 0 : index
    %c0_31 = arith.constant 0 : index
    %189 = vector.load %arg6[%c0_30, %c0_31] : memref<1x32xf32, #tpu.memory_space<vmem>>, vector<1x32xf32>
    %190 = vector.shape_cast %189 : vector<1x32xf32> to vector<1x1x32xf32>
    %191 = vector.broadcast %190 : vector<1x1x32xf32> to vector<2x1x32xf32>
    %192 = arith.mulf %188, %191 : vector<2x1x32xf32>
    %cst_32 = arith.constant dense<0.000000e+00> : vector<2x1xf32>
    %193 = vector.multi_reduction <add>, %192, %cst_32 [2] : vector<2x1x32xf32> to vector<2x1xf32>
    %c0_33 = arith.constant 0 : index
    %c0_34 = arith.constant 0 : index
    %194 = vector.load %arg7[%c0_33, %c0_34] : memref<1x1xf32, #tpu.memory_space<vmem>>, vector<1x1xf32>
    %195 = vector.broadcast %194 : vector<1x1xf32> to vector<2x1xf32>
    %196 = arith.addf %193, %195 : vector<2x1xf32>
    %c0_35 = arith.constant 0 : index
    %c0_36 = arith.constant 0 : index
    %197 = vector.load %arg8[%c0_35, %c0_36] : memref<2x1xf32, #tpu.memory_space<vmem>>, vector<2x1xf32>
    tpu.vector_store %arg8[%c0_35, %c0_36], %196 {strides = array<i32>} : memref<2x1xf32, #tpu.memory_space<vmem>>, vector<2x1xf32>,
    return
  }
}

</mosaic_0001>

<llo_original>
// kernel: tpu_custom_call.1
$region0: #{tpu_custom_call.1}
  #allocation0 [shape = 'u32[]', space=smem, size = 0x4, offset = 0x4, fixed_abs, tag = 'smem constant byte address 0x4 - core index']
  #allocation1 [shape = 'u32[144,128]{1,0:T(1,128)}', space=vmem, size = 0x12000, scoped, tag = 'internal scratch']
  #allocation2 [shape = 'f32[1,1]{1,0:T(1,128)S(1)}', space=vmem, size = 0x200, scoped, tag = 'scoped memory for tpu_custom_call.1']
  %s0 = inlined_call_operand.vmem [shape: f32[16,2], index: 0, kind: input, shape index: {}]
  %s1 = inlined_call_operand.vmem [shape: f32[2,256], index: 1, kind: input, shape index: {}]
  %s2 = inlined_call_operand.vmem [shape: f32[1,256], index: 2, kind: input, shape index: {}]
  %s3 = inlined_call_operand.hbm [shape: f32[64,256], index: 3, kind: input, shape index: {}]
  %s4 = inlined_call_operand.hbm [shape: f32[64,128], index: 4, kind: input, shape index: {}]
  %s5 = inlined_call_operand.vmem [shape: f32[1,128], index: 5, kind: input, shape index: {}]
  %s6 = inlined_call_operand.vmem [shape: f32[1,32], index: 6, kind: input, shape index: {}]
  %s7 = inlined_call_operand.<no memory space> [shape: f32[1,1], index: 7, kind: input, shape index: {}]
  %s8 = inlined_call_operand.vmem [shape: f32[2,1], index: 8, kind: output, shape index: {}]
  %s9 = sld [smem:[#allocation0]]
  $region50: #{tpu_custom_call.1} parent=0
    _
  %s11 = ssub.s32 1, %s9
  %s12 = scalar_select 0, %s11, %s9
  %v13 = vstv %s7
  %14 = vst [vmem:[#allocation2] sm:$0x1] %v13
  $region1: #{tpu_custom_call.1} parent=0
    #allocation3 [shape = 'u8[65536]{0}', space=vmem, size = 0x10000, scoped, tag = 'input window, operand 3, single buffered']
    #allocation4 [shape = 's32[1]{0}', space=sflag, size = 0x4, scoped, tag = 'scoped memory for tpu_custom_call.1']
    #allocation5 [shape = 'u8[32768]{0}', space=vmem, size = 0x8000, scoped, tag = 'input window, operand 4, single buffered']
    #allocation6 [shape = 's32[1]{0}', space=sflag, size = 0x4, scoped, tag = 'scoped memory for tpu_custom_call.1']
    %15 = vsyncpa [#allocation4], 0
    %16 = vsyncpa [#allocation6], 0
    // Predicated region
    $region2: #{tpu_custom_call.1} parent=1 // pred_check
      _
    $region3: #{tpu_custom_call.1} parent=1 // pred_check_branch
      %18 = sbr.rel (0) target = $region5
    $region4: #{tpu_custom_call.1} parent=1 // pred_region
      _
    $region5: #{tpu_custom_call.1} parent=1 // pred_fallthru
      _
    // Predicated region
    $region6: #{tpu_custom_call.1} parent=1 // pred_check
      _
    $region7: #{tpu_custom_call.1} parent=1 // pred_check_branch
      %20 = sbr.rel (0) target = $region9
    $region8: #{tpu_custom_call.1} parent=1 // pred_region
      _
    $region9: #{tpu_custom_call.1} parent=1 // pred_fallthru
      _
    // Predicated region
    $region10: #{tpu_custom_call.1} parent=1 // pred_check
      _
    $region11: #{tpu_custom_call.1} parent=1 // pred_check_branch
      %22 = sbr.rel (0) target = $region13
    $region12: #{tpu_custom_call.1} parent=1 // pred_region
      _
    $region13: #{tpu_custom_call.1} parent=1 // pred_fallthru
      _
    // Predicated region
    $region14: #{tpu_custom_call.1} parent=1 // pred_check
      _
    $region15: #{tpu_custom_call.1} parent=1 // pred_check_branch
      %24 = sbr.rel (0) target = $region17
    $region16: #{tpu_custom_call.1} parent=1 // pred_region
      %s26 = ssub.s32 2048, 2048
      %27 = vsyncadd [#allocation4], %s26
      %s28 = sshll.u32 [#allocation3], 4
      %s29 = int_to_ptr.vmem [resolvable:$true] %s28
      %34 = dma.hbm_to_vmem [thread:$0]  %s3, 2048, %s29, [#allocation4], 256, 256, 16
    $region17: #{tpu_custom_call.1} parent=1 // pred_fallthru
      _
    // Predicated region
    $region18: #{tpu_custom_call.1} parent=1 // pred_check
      _
    $region19: #{tpu_custom_call.1} parent=1 // pred_check_branch
      %36 = sbr.rel (0) target = $region21
    $region20: #{tpu_custom_call.1} parent=1 // pred_region
      %s38 = ssub.s32 1024, 1024
      %39 = vsyncadd [#allocation6], %s38
      %s40 = sshll.u32 [#allocation5], 4
      %s41 = int_to_ptr.vmem [resolvable:$true] %s40
      %46 = dma.hbm_to_vmem [thread:$0]  %s4, 1024, %s41, [#allocation6], 128, 128, 8
    $region21: #{tpu_custom_call.1} parent=1 // pred_fallthru
      _
    // Predicated region
    $region22: #{tpu_custom_call.1} parent=1 // pred_check
      _
    $region23: #{tpu_custom_call.1} parent=1 // pred_check_branch
      %48 = sbr.rel (0) target = $region25
    $region24: #{tpu_custom_call.1} parent=1 // pred_region
      _
    $region25: #{tpu_custom_call.1} parent=1 // pred_fallthru
      _
    // Predicated region
    $region26: #{tpu_custom_call.1} parent=1 // pred_check
      _
    $region27: #{tpu_custom_call.1} parent=1 // pred_check_branch
      %50 = sbr.rel (0) target = $region29
    $region28: #{tpu_custom_call.1} parent=1 // pred_region
      _
    $region29: #{tpu_custom_call.1} parent=1 // pred_fallthru
      _
    // Predicated region
    $region30: #{tpu_custom_call.1} parent=1 // pred_check
      _
    $region31: #{tpu_custom_call.1} parent=1 // pred_check_branch
      %52 = sbr.rel (0) target = $region33
    $region32: #{tpu_custom_call.1} parent=1 // pred_region
      _
    $region33: #{tpu_custom_call.1} parent=1 // pred_fallthru
      _
    // Predicated region
    $region34: #{tpu_custom_call.1} parent=1 // pred_check
      _
    $region35: #{tpu_custom_call.1} parent=1 // pred_check_branch
      %54 = sbr.rel (0) target = $region37
    $region36: #{tpu_custom_call.1} parent=1 // pred_region
      %55 = dma.done [#allocation4], 2048
    $region37: #{tpu_custom_call.1} parent=1 // pred_fallthru
      _
    // Predicated region
    $region38: #{tpu_custom_call.1} parent=1 // pred_check
      _
    $region39: #{tpu_custom_call.1} parent=1 // pred_check_branch
      %57 = sbr.rel (0) target = $region41
    $region40: #{tpu_custom_call.1} parent=1 // pred_region
      %58 = dma.done [#allocation6], 1024
    $region41: #{tpu_custom_call.1} parent=1 // pred_fallthru
      _
    %v59 = vld [vmem:[%s0] sm:$0xff]
    %v60 = vld [vmem:[%s0 + $0x8] sm:$0xff]
    %v61 = vld [vmem:[%s1] sm:$0xf]
    %v62 = vld [vmem:[%s2] sm:$0x3]
    %v64 = vlaneseq
    %v65 = vshrl.u32 %v64, 7
    %v66 = vsub.s32 0, %v65
    %v67 = vrot.slane %v62, %v66
    %v68 = vlaneseq
    %v69 = vshrl.u32 %v68, 7
    %v70 = vsub.s32 1, %v69
    %v71 = vrot.slane %v62, %v70
    %v76 = vunpack.c.l.s4 1983009808
    %v77 = vunpack.c.0.s8 %v76
    %v78 = vlaneseq
    %v79 = vshrl.u32 %v78, 7
    %v80 = vsub.s32 %v77, %v79
    %v81 = vrot.slane %v61, %v80
    %v82 = vcombine.high %v81, %v81
    %vm83 = vcmask 15360
    %v85 = vsel %vm83, %v59, 0
    %v88 = vsel %vm83, %v60, 0
    %vm90 = vcmask 1041408
    %v91 = vsel %vm90, %v81, 0
    %v93 = vsel %vm90, %v82, 0
    %95 = vmatprep.subr.mxu0 0.0
    %96 = vmatpush1.msra.mxu0 0.0
    %97 = vmatprep.subr.mxu0 0.0
    %98 = vmatpush1.msra.mxu0 0.0
    %99 = vmatprep.subr.mxu0 0.0
    %100 = vmatpush1.msra.mxu0 0.0
    %101 = vmatprep.subr.mxu0 0.0
    %102 = vmatpush1.msra.mxu0 0.0
    %103 = vmatprep.subr.mxu0 0.0
    %104 = vmatpush1.msra.mxu0 0.0
    %105 = vmatprep.subr.mxu0 0.0
    %106 = vmatpush1.msra.mxu0 0.0
    %107 = vmatprep.subr.mxu0 0.0
    %108 = vmatpush1.msra.mxu0 0.0
    %109 = vmatprep.subr.mxu0 0.0
    %110 = vmatpush1.msra.mxu0 0.0
    %111 = vmatprep.subr.mxu0 0.0
    %112 = vmatpush1.msra.mxu0 0.0
    %113 = vmatprep.subr.mxu0 0.0
    %114 = vmatpush1.msra.mxu0 0.0
    %115 = vmatprep.subr.mxu0 0.0
    %116 = vmatpush1.msra.mxu0 0.0
    %117 = vmatprep.subr.mxu0 0.0
    %118 = vmatpush1.msra.mxu0 0.0
    %119 = vmatprep.subr.mxu0 0.0
    %120 = vmatpush1.msra.mxu0 0.0
    %121 = vmatprep.subr.mxu0 0.0
    %122 = vmatpush1.msra.mxu0 0.0
    %123 = vmatprep.subr.mxu0 0.0
    %124 = vmatpush1.msra.mxu0 0.0
    %125 = vmatprep.subr.mxu0 %v93
    %126 = vmatpush1.msra.mxu0 %v91
    %127 = vmatprep.subr.mxu0 0.0
    %128 = vmatpush2.msra.mxu0 0.0
    %129 = vmatprep.subr.mxu0 0.0
    %130 = vmatpush2.msra.mxu0 0.0
    %131 = vmatprep.subr.mxu0 0.0
    %132 = vmatpush2.msra.mxu0 0.0
    %133 = vmatprep.subr.mxu0 0.0
    %134 = vmatpush2.msra.mxu0 0.0
    %135 = vmatprep.subr.mxu0 0.0
    %136 = vmatpush2.msra.mxu0 0.0
    %137 = vmatprep.subr.mxu0 0.0
    %138 = vmatpush2.msra.mxu0 0.0
    %139 = vmatprep.subr.mxu0 0.0
    %140 = vmatpush2.msra.mxu0 0.0
    %141 = vmatprep.subr.mxu0 0.0
    %142 = vmatpush2.msra.mxu0 0.0
    %143 = vmatprep.subr.mxu0 0.0
    %144 = vmatpush2.msra.mxu0 0.0
    %145 = vmatprep.subr.mxu0 0.0
    %146 = vmatpush2.msra.mxu0 0.0
    %147 = vmatprep.subr.mxu0 0.0
    %148 = vmatpush2.msra.mxu0 0.0
    %149 = vmatprep.subr.mxu0 0.0
    %150 = vmatpush2.msra.mxu0 0.0
    %151 = vmatprep.subr.mxu0 0.0
    %152 = vmatpush2.msra.mxu0 0.0
    %153 = vmatprep.subr.mxu0 0.0
    %154 = vmatpush2.msra.mxu0 0.0
    %155 = vmatprep.subr.mxu0 0.0
    %156 = vmatpush2.msra.mxu0 0.0
    %157 = vmatprep.subr.mxu0 0.0
    %158 = vmatpush2.msra.mxu0 0.0
    %159 = vmatprep.mubr.f32.mxu0 0.0
    %160 = vmatmul.mubr.f32.gmra.mxu0 %v85
    %v161 = vpop.f32.mrf.mxu0
    %v162 = vadd.f32 %v67, %v161
    %v163 = vpop.f32.mrf.mxu0
    %v164 = vadd.f32 %v71, %v163
    %165 = vmatprep.mubr.f32.mxu0 0.0
    %166 = vmatmul.mubr.f32.gmra.mxu0 %v88
    %v167 = vpop.f32.mrf.mxu0
    %v168 = vadd.f32 %v67, %v167
    %v169 = vpop.f32.mrf.mxu0
    %v170 = vadd.f32 %v71, %v169
    %171 = vdwg.mxu0
    %v172 = vld [vmem:[#allocation3] sm:$0xff]
    %v173 = vld [vmem:[#allocation3 + $0x8] sm:$0xff]
    %v174 = vld [vmem:[#allocation3 + $0x10] sm:$0xff]
    %v175 = vld [vmem:[#allocation3 + $0x18] sm:$0xff]
    %v176 = vld [vmem:[#allocation3 + $0x20] sm:$0xff]
    %v177 = vld [vmem:[#allocation3 + $0x28] sm:$0xff]
    %v178 = vld [vmem:[#allocation3 + $0x30] sm:$0xff]
    %v179 = vld [vmem:[#allocation3 + $0x38] sm:$0xff]
    %v180 = vld [vmem:[#allocation3 + $0x40] sm:$0xff]
    %v181 = vld [vmem:[#allocation3 + $0x48] sm:$0xff]
    %v182 = vld [vmem:[#allocation3 + $0x50] sm:$0xff]
    %v183 = vld [vmem:[#allocation3 + $0x58] sm:$0xff]
    %v184 = vld [vmem:[#allocation3 + $0x60] sm:$0xff]
    %v185 = vld [vmem:[#allocation3 + $0x68] sm:$0xff]
    %v186 = vld [vmem:[#allocation3 + $0x70] sm:$0xff]
    %v187 = vld [vmem:[#allocation3 + $0x78] sm:$0xff]
    %v188 = vlaneseq
    %v189 = vand.u32 %v188, 127
    %v190 = vadd.s32 %v189, 128
    %vm191 = vcmp.ge.s32.totalorder %v189, 32
    %vm192 = vcmp.ge.s32.totalorder %v190, 32
    %vm193 = vcmp.lt.s32.totalorder %v189, 64
    %vm194 = vcmp.lt.s32.totalorder %v190, 64
    %vm195 = vmand %vm191, %vm193
    %vm196 = vmand %vm192, %vm194
    %v197 = vsel %vm195, -1e+09, %v162
    %v198 = vsel %vm196, -1e+09, %v164
    %v199 = vxor.u32 %v197, 2147483648
    %v200 = vxor.u32 %v198, 2147483648
    %v201 = vmul.f32 %v199, 1.442695
    %v202 = vpow.pop %v201
    %v203 = vmul.f32 %v200, 1.442695
    %v204 = vpow.pop %v203
    %v205 = vadd.f32 %v202, 1.0
    %v206 = vadd.f32 %v204, 1.0
    %v207 = vrcp.pop %v205
    %v208 = vmul.f32 1.0, %v207
    %v209 = vrcp.pop %v206
    %v210 = vmul.f32 1.0, %v209
    %v211 = vtanh.pop %v198
    %v212 = vmul.f32 %v208, 0.0
    %214 = vrot.lane.b32.xlu0 %v211, 64
    %v215 = vpop.permute.xlu0 %214
    %v217 = vmul.f32 %v208, %v215
    %219 = vrot.lane.b32.xlu0 %v217, 64
    %v220 = vpop.permute.xlu0 %219
    %v222 = vadd.f32 %v212, %v220
    %v223 = vtanh.pop %v222
    %225 = vrot.lane.b32.xlu0 %v223, 64
    %v226 = vpop.permute.xlu0 %225
    %v228 = vmul.f32 %v210, %v226
    %vm229 = vcmask 523264
    %v231 = vsel %vm229, %v228, 0
    %233 = vmatprep.subr.mxu0 0.0
    %234 = vmatpush1.msra.mxu0 0.0
    %235 = vmatprep.subr.mxu0 0.0
    %236 = vmatpush1.msra.mxu0 0.0
    %237 = vmatprep.subr.mxu0 0.0
    %238 = vmatpush1.msra.mxu0 0.0
    %239 = vmatprep.subr.mxu0 0.0
    %240 = vmatpush1.msra.mxu0 0.0
    %241 = vmatprep.subr.mxu0 0.0
    %242 = vmatpush1.msra.mxu0 0.0
    %243 = vmatprep.subr.mxu0 0.0
    %244 = vmatpush1.msra.mxu0 0.0
    %245 = vmatprep.subr.mxu0 0.0
    %246 = vmatpush1.msra.mxu0 0.0
    %247 = vmatprep.subr.mxu0 0.0
    %248 = vmatpush1.msra.mxu0 0.0
    %249 = vmatprep.subr.mxu0 %v187
    %250 = vmatpush1.msra.mxu0 %v186
    %251 = vmatprep.subr.mxu0 %v185
    %252 = vmatpush1.msra.mxu0 %v184
    %253 = vmatprep.subr.mxu0 %v183
    %254 = vmatpush1.msra.mxu0 %v182
    %255 = vmatprep.subr.mxu0 %v181
    %256 = vmatpush1.msra.mxu0 %v180
    %257 = vmatprep.subr.mxu0 %v179
    %258 = vmatpush1.msra.mxu0 %v178
    %259 = vmatprep.subr.mxu0 %v177
    %260 = vmatpush1.msra.mxu0 %v176
    %261 = vmatprep.subr.mxu0 %v175
    %262 = vmatpush1.msra.mxu0 %v174
    %263 = vmatprep.subr.mxu0 %v173
    %264 = vmatpush1.msra.mxu0 %v172
    %265 = vmatprep.subr.mxu0 0.0
    %266 = vmatpush2.msra.mxu0 0.0
    %267 = vmatprep.subr.mxu0 0.0
    %268 = vmatpush2.msra.mxu0 0.0
    %269 = vmatprep.subr.mxu0 0.0
    %270 = vmatpush2.msra.mxu0 0.0
    %271 = vmatprep.subr.mxu0 0.0
    %272 = vmatpush2.msra.mxu0 0.0
    %273 = vmatprep.subr.mxu0 0.0
    %274 = vmatpush2.msra.mxu0 0.0
    %275 = vmatprep.subr.mxu0 0.0
    %276 = vmatpush2.msra.mxu0 0.0
    %277 = vmatprep.subr.mxu0 0.0
    %278 = vmatpush2.msra.mxu0 0.0
    %279 = vmatprep.subr.mxu0 0.0
    %280 = vmatpush2.msra.mxu0 0.0
    %281 = vmatprep.subr.mxu0 0.0
    %282 = vmatpush2.msra.mxu0 0.0
    %283 = vmatprep.subr.mxu0 0.0
    %284 = vmatpush2.msra.mxu0 0.0
    %285 = vmatprep.subr.mxu0 0.0
    %286 = vmatpush2.msra.mxu0 0.0
    %287 = vmatprep.subr.mxu0 0.0
    %288 = vmatpush2.msra.mxu0 0.0
    %289 = vmatprep.subr.mxu0 0.0
    %290 = vmatpush2.msra.mxu0 0.0
    %291 = vmatprep.subr.mxu0 0.0
    %292 = vmatpush2.msra.mxu0 0.0
    %293 = vmatprep.subr.mxu0 0.0
    %294 = vmatpush2.msra.mxu0 0.0
    %295 = vmatprep.subr.mxu0 0.0
    %296 = vmatpush2.msra.mxu0 0.0
    %297 = vmatprep.mubr.f32.mxu0 0.0
    %298 = vmatmul.mubr.f32.gmra.mxu0 %v231
    %v299 = vpop.f32.mrf.mxu0
    %v300 = vadd.f32 0.0, %v299
    %v301 = vpop.f32.mrf.mxu0
    %v302 = vadd.f32 0.0, %v301
    %303 = vdwg.mxu0
    %v306 = vrot.slane %v300, 6
    %v307 = vrot.slane %v302, 6
    %v310 = vadd.f32 %v162, %v306
    %v311 = vadd.f32 %v164, %v307
    %v312 = vxor.u32 %v310, 2147483648
    %v313 = vxor.u32 %v311, 2147483648
    %v314 = vmul.f32 %v312, 1.442695
    %v315 = vpow.pop %v314
    %v316 = vmul.f32 %v313, 1.442695
    %v317 = vpow.pop %v316
    %v318 = vadd.f32 %v315, 1.0
    %v319 = vadd.f32 %v317, 1.0
    %v320 = vrcp.pop %v318
    %v321 = vmul.f32 1.0, %v320
    %v322 = vrcp.pop %v319
    %v323 = vmul.f32 1.0, %v322
    %v324 = vtanh.pop %v311
    %v326 = vrot.slane %v222, 6
    %v328 = vmul.f32 %v321, %v326
    %330 = vrot.lane.b32.xlu0 %v324, 64
    %v331 = vpop.permute.xlu0 %330
    %v333 = vmul.f32 %v321, %v331
    %335 = vrot.lane.b32.xlu0 %v333, 64
    %v336 = vpop.permute.xlu0 %335
    %v338 = vadd.f32 %v328, %v336
    %v339 = vtanh.pop %v338
    %341 = vrot.lane.b32.xlu0 %v339, 64
    %v342 = vpop.permute.xlu0 %341
    %v344 = vmul.f32 %v323, %v342
    %v346 = vrot.slane %v344, 2
    %v347 = vsel %vm229, %v346, 0
    %349 = vmatprep.subr.mxu0 0.0
    %350 = vmatpush1.msra.mxu0 0.0
    %351 = vmatprep.subr.mxu0 0.0
    %352 = vmatpush1.msra.mxu0 0.0
    %353 = vmatprep.subr.mxu0 0.0
    %354 = vmatpush1.msra.mxu0 0.0
    %355 = vmatprep.subr.mxu0 0.0
    %356 = vmatpush1.msra.mxu0 0.0
    %357 = vmatprep.subr.mxu0 0.0
    %358 = vmatpush1.msra.mxu0 0.0
    %359 = vmatprep.subr.mxu0 0.0
    %360 = vmatpush1.msra.mxu0 0.0
    %361 = vmatprep.subr.mxu0 0.0
    %362 = vmatpush1.msra.mxu0 0.0
    %363 = vmatprep.subr.mxu0 0.0
    %364 = vmatpush1.msra.mxu0 0.0
    %365 = vmatprep.subr.mxu0 %v187
    %366 = vmatpush1.msra.mxu0 %v186
    %367 = vmatprep.subr.mxu0 %v185
    %368 = vmatpush1.msra.mxu0 %v184
    %369 = vmatprep.subr.mxu0 %v183
    %370 = vmatpush1.msra.mxu0 %v182
    %371 = vmatprep.subr.mxu0 %v181
    %372 = vmatpush1.msra.mxu0 %v180
    %373 = vmatprep.subr.mxu0 %v179
    %374 = vmatpush1.msra.mxu0 %v178
    %375 = vmatprep.subr.mxu0 %v177
    %376 = vmatpush1.msra.mxu0 %v176
    %377 = vmatprep.subr.mxu0 %v175
    %378 = vmatpush1.msra.mxu0 %v174
    %379 = vmatprep.subr.mxu0 %v173
    %380 = vmatpush1.msra.mxu0 %v172
    %381 = vmatprep.subr.mxu0 0.0
    %382 = vmatpush2.msra.mxu0 0.0
    %383 = vmatprep.subr.mxu0 0.0
    %384 = vmatpush2.msra.mxu0 0.0
    %385 = vmatprep.subr.mxu0 0.0
    %386 = vmatpush2.msra.mxu0 0.0
    %387 = vmatprep.subr.mxu0 0.0
    %388 = vmatpush2.msra.mxu0 0.0
    %389 = vmatprep.subr.mxu0 0.0
    %390 = vmatpush2.msra.mxu0 0.0
    %391 = vmatprep.subr.mxu0 0.0
    %392 = vmatpush2.msra.mxu0 0.0
    %393 = vmatprep.subr.mxu0 0.0
    %394 = vmatpush2.msra.mxu0 0.0
    %395 = vmatprep.subr.mxu0 0.0
    %396 = vmatpush2.msra.mxu0 0.0
    %397 = vmatprep.subr.mxu0 0.0
    %398 = vmatpush2.msra.mxu0 0.0
    %399 = vmatprep.subr.mxu0 0.0
    %400 = vmatpush2.msra.mxu0 0.0
    %401 = vmatprep.subr.mxu0 0.0
    %402 = vmatpush2.msra.mxu0 0.0
    %403 = vmatprep.subr.mxu0 0.0
    %404 = vmatpush2.msra.mxu0 0.0
    %405 = vmatprep.subr.mxu0 0.0
    %406 = vmatpush2.msra.mxu0 0.0
    %407 = vmatprep.subr.mxu0 0.0
    %408 = vmatpush2.msra.mxu0 0.0
    %409 = vmatprep.subr.mxu0 0.0
    %410 = vmatpush2.msra.mxu0 0.0
    %411 = vmatprep.subr.mxu0 0.0
    %412 = vmatpush2.msra.mxu0 0.0
    %413 = vmatprep.mubr.f32.mxu0 0.0
    %414 = vmatmul.mubr.f32.gmra.mxu0 %v347
    %v415 = vpop.f32.mrf.mxu0
    %v416 = vadd.f32 0.0, %v415
    %v417 = vpop.f32.mrf.mxu0
    %v418 = vadd.f32 0.0, %v417
    %419 = vdwg.mxu0
    %v422 = vrot.slane %v416, 4
    %v423 = vrot.slane %v418, 4
    %v426 = vadd.f32 %v162, %v422
    %v427 = vadd.f32 %v164, %v423
    %v428 = vxor.u32 %v426, 2147483648
    %v429 = vxor.u32 %v427, 2147483648
    %v430 = vmul.f32 %v428, 1.442695
    %v431 = vpow.pop %v430
    %v432 = vmul.f32 %v429, 1.442695
    %v433 = vpow.pop %v432
    %v434 = vadd.f32 %v431, 1.0
    %v435 = vadd.f32 %v433, 1.0
    %v436 = vrcp.pop %v434
    %v437 = vmul.f32 1.0, %v436
    %v438 = vrcp.pop %v435
    %v439 = vmul.f32 1.0, %v438
    %v440 = vtanh.pop %v427
    %v442 = vrot.slane %v338, 6
    %v444 = vmul.f32 %v437, %v442
    %446 = vrot.lane.b32.xlu0 %v440, 64
    %v447 = vpop.permute.xlu0 %446
    %v449 = vmul.f32 %v437, %v447
    %451 = vrot.lane.b32.xlu0 %v449, 64
    %v452 = vpop.permute.xlu0 %451
    %v454 = vadd.f32 %v444, %v452
    %v455 = vtanh.pop %v454
    %457 = vrot.lane.b32.xlu0 %v455, 64
    %v458 = vpop.permute.xlu0 %457
    %v460 = vmul.f32 %v439, %v458
    %v462 = vrot.slane %v460, 4
    %v463 = vsel %vm229, %v462, 0
    %465 = vmatprep.subr.mxu0 0.0
    %466 = vmatpush1.msra.mxu0 0.0
    %467 = vmatprep.subr.mxu0 0.0
    %468 = vmatpush1.msra.mxu0 0.0
    %469 = vmatprep.subr.mxu0 0.0
    %470 = vmatpush1.msra.mxu0 0.0
    %471 = vmatprep.subr.mxu0 0.0
    %472 = vmatpush1.msra.mxu0 0.0
    %473 = vmatprep.subr.mxu0 0.0
    %474 = vmatpush1.msra.mxu0 0.0
    %475 = vmatprep.subr.mxu0 0.0
    %476 = vmatpush1.msra.mxu0 0.0
    %477 = vmatprep.subr.mxu0 0.0
    %478 = vmatpush1.msra.mxu0 0.0
    %479 = vmatprep.subr.mxu0 0.0
    %480 = vmatpush1.msra.mxu0 0.0
    %481 = vmatprep.subr.mxu0 %v187
    %482 = vmatpush1.msra.mxu0 %v186
    %483 = vmatprep.subr.mxu0 %v185
    %484 = vmatpush1.msra.mxu0 %v184
    %485 = vmatprep.subr.mxu0 %v183
    %486 = vmatpush1.msra.mxu0 %v182
    %487 = vmatprep.subr.mxu0 %v181
    %488 = vmatpush1.msra.mxu0 %v180
    %489 = vmatprep.subr.mxu0 %v179
    %490 = vmatpush1.msra.mxu0 %v178
    %491 = vmatprep.subr.mxu0 %v177
    %492 = vmatpush1.msra.mxu0 %v176
    %493 = vmatprep.subr.mxu0 %v175
    %494 = vmatpush1.msra.mxu0 %v174
    %495 = vmatprep.subr.mxu0 %v173
    %496 = vmatpush1.msra.mxu0 %v172
    %497 = vmatprep.subr.mxu0 0.0
    %498 = vmatpush2.msra.mxu0 0.0
    %499 = vmatprep.subr.mxu0 0.0
    %500 = vmatpush2.msra.mxu0 0.0
    %501 = vmatprep.subr.mxu0 0.0
    %502 = vmatpush2.msra.mxu0 0.0
    %503 = vmatprep.subr.mxu0 0.0
    %504 = vmatpush2.msra.mxu0 0.0
    %505 = vmatprep.subr.mxu0 0.0
    %506 = vmatpush2.msra.mxu0 0.0
    %507 = vmatprep.subr.mxu0 0.0
    %508 = vmatpush2.msra.mxu0 0.0
    %509 = vmatprep.subr.mxu0 0.0
    %510 = vmatpush2.msra.mxu0 0.0
    %511 = vmatprep.subr.mxu0 0.0
    %512 = vmatpush2.msra.mxu0 0.0
    %513 = vmatprep.subr.mxu0 0.0
    %514 = vmatpush2.msra.mxu0 0.0
    %515 = vmatprep.subr.mxu0 0.0
    %516 = vmatpush2.msra.mxu0 0.0
    %517 = vmatprep.subr.mxu0 0.0
    %518 = vmatpush2.msra.mxu0 0.0
    %519 = vmatprep.subr.mxu0 0.0
    %520 = vmatpush2.msra.mxu0 0.0
    %521 = vmatprep.subr.mxu0 0.0
    %522 = vmatpush2.msra.mxu0 0.0
    %523 = vmatprep.subr.mxu0 0.0
    %524 = vmatpush2.msra.mxu0 0.0
    %525 = vmatprep.subr.mxu0 0.0
    %526 = vmatpush2.msra.mxu0 0.0
    %527 = vmatprep.subr.mxu0 0.0
    %528 = vmatpush2.msra.mxu0 0.0
    %529 = vmatprep.mubr.f32.mxu0 0.0
    %530 = vmatmul.mubr.f32.gmra.mxu0 %v463
    %v531 = vpop.f32.mrf.mxu0
    %v532 = vadd.f32 0.0, %v531
    %v533 = vpop.f32.mrf.mxu0
    %v534 = vadd.f32 0.0, %v533
    %535 = vdwg.mxu0
    %v538 = vrot.slane %v532, 2
    %v539 = vrot.slane %v534, 2
    %v542 = vadd.f32 %v162, %v538
    %v543 = vadd.f32 %v164, %v539
    %v544 = vxor.u32 %v542, 2147483648
    %v545 = vxor.u32 %v543, 2147483648
    %v546 = vmul.f32 %v544, 1.442695
    %v547 = vpow.pop %v546
    %v548 = vmul.f32 %v545, 1.442695
    %v549 = vpow.pop %v548
    %v550 = vadd.f32 %v547, 1.0
    %v551 = vadd.f32 %v549, 1.0
    %v552 = vrcp.pop %v550
    %v553 = vmul.f32 1.0, %v552
    %v554 = vrcp.pop %v551
    %v555 = vmul.f32 1.0, %v554
    %v556 = vtanh.pop %v543
    %v558 = vrot.slane %v454, 6
    %v560 = vmul.f32 %v553, %v558
    %562 = vrot.lane.b32.xlu0 %v556, 64
    %v563 = vpop.permute.xlu0 %562
    %v565 = vmul.f32 %v553, %v563
    %567 = vrot.lane.b32.xlu0 %v565, 64
    %v568 = vpop.permute.xlu0 %567
    %v570 = vadd.f32 %v560, %v568
    %v571 = vtanh.pop %v570
    %573 = vrot.lane.b32.xlu0 %v571, 64
    %v574 = vpop.permute.xlu0 %573
    %v576 = vmul.f32 %v555, %v574
    %v578 = vrot.slane %v576, 6
    %v579 = vsel %vm229, %v578, 0
    %581 = vmatprep.subr.mxu0 0.0
    %582 = vmatpush1.msra.mxu0 0.0
    %583 = vmatprep.subr.mxu0 0.0
    %584 = vmatpush1.msra.mxu0 0.0
    %585 = vmatprep.subr.mxu0 0.0
    %586 = vmatpush1.msra.mxu0 0.0
    %587 = vmatprep.subr.mxu0 0.0
    %588 = vmatpush1.msra.mxu0 0.0
    %589 = vmatprep.subr.mxu0 0.0
    %590 = vmatpush1.msra.mxu0 0.0
    %591 = vmatprep.subr.mxu0 0.0
    %592 = vmatpush1.msra.mxu0 0.0
    %593 = vmatprep.subr.mxu0 0.0
    %594 = vmatpush1.msra.mxu0 0.0
    %595 = vmatprep.subr.mxu0 0.0
    %596 = vmatpush1.msra.mxu0 0.0
    %597 = vmatprep.subr.mxu0 %v187
    %598 = vmatpush1.msra.mxu0 %v186
    %599 = vmatprep.subr.mxu0 %v185
    %600 = vmatpush1.msra.mxu0 %v184
    %601 = vmatprep.subr.mxu0 %v183
    %602 = vmatpush1.msra.mxu0 %v182
    %603 = vmatprep.subr.mxu0 %v181
    %604 = vmatpush1.msra.mxu0 %v180
    %605 = vmatprep.subr.mxu0 %v179
    %606 = vmatpush1.msra.mxu0 %v178
    %607 = vmatprep.subr.mxu0 %v177
    %608 = vmatpush1.msra.mxu0 %v176
    %609 = vmatprep.subr.mxu0 %v175
    %610 = vmatpush1.msra.mxu0 %v174
    %611 = vmatprep.subr.mxu0 %v173
    %612 = vmatpush1.msra.mxu0 %v172
    %613 = vmatprep.subr.mxu0 0.0
    %614 = vmatpush2.msra.mxu0 0.0
    %615 = vmatprep.subr.mxu0 0.0
    %616 = vmatpush2.msra.mxu0 0.0
    %617 = vmatprep.subr.mxu0 0.0
    %618 = vmatpush2.msra.mxu0 0.0
    %619 = vmatprep.subr.mxu0 0.0
    %620 = vmatpush2.msra.mxu0 0.0
    %621 = vmatprep.subr.mxu0 0.0
    %622 = vmatpush2.msra.mxu0 0.0
    %623 = vmatprep.subr.mxu0 0.0
    %624 = vmatpush2.msra.mxu0 0.0
    %625 = vmatprep.subr.mxu0 0.0
    %626 = vmatpush2.msra.mxu0 0.0
    %627 = vmatprep.subr.mxu0 0.0
    %628 = vmatpush2.msra.mxu0 0.0
    %629 = vmatprep.subr.mxu0 0.0
    %630 = vmatpush2.msra.mxu0 0.0
    %631 = vmatprep.subr.mxu0 0.0
    %632 = vmatpush2.msra.mxu0 0.0
    %633 = vmatprep.subr.mxu0 0.0
    %634 = vmatpush2.msra.mxu0 0.0
    %635 = vmatprep.subr.mxu0 0.0
    %636 = vmatpush2.msra.mxu0 0.0
    %637 = vmatprep.subr.mxu0 0.0
    %638 = vmatpush2.msra.mxu0 0.0
    %639 = vmatprep.subr.mxu0 0.0
    %640 = vmatpush2.msra.mxu0 0.0
    %641 = vmatprep.subr.mxu0 0.0
    %642 = vmatpush2.msra.mxu0 0.0
    %643 = vmatprep.subr.mxu0 0.0
    %644 = vmatpush2.msra.mxu0 0.0
    %645 = vmatprep.mubr.f32.mxu0 0.0
    %646 = vmatmul.mubr.f32.gmra.mxu0 %v579
    %v647 = vpop.f32.mrf.mxu0
    %v648 = vadd.f32 0.0, %v647
    %v649 = vpop.f32.mrf.mxu0
    %v650 = vadd.f32 0.0, %v649
    %651 = vdwg.mxu0
    %v652 = vadd.f32 %v168, %v648
    %v653 = vadd.f32 %v170, %v650
    %v654 = vxor.u32 %v652, 2147483648
    %v655 = vxor.u32 %v653, 2147483648
    %v656 = vmul.f32 %v654, 1.442695
    %v657 = vpow.pop %v656
    %v658 = vmul.f32 %v655, 1.442695
    %v659 = vpow.pop %v658
    %v660 = vadd.f32 %v657, 1.0
    %v661 = vadd.f32 %v659, 1.0
    %v662 = vrcp.pop %v660
    %v663 = vmul.f32 1.0, %v662
    %v664 = vrcp.pop %v661
    %v665 = vmul.f32 1.0, %v664
    %v666 = vtanh.pop %v653
    %v668 = vrot.slane %v570, 6
    %v670 = vmul.f32 %v663, %v668
    %672 = vrot.lane.b32.xlu0 %v666, 64
    %v673 = vpop.permute.xlu0 %672
    %v675 = vmul.f32 %v663, %v673
    %677 = vrot.lane.b32.xlu0 %v675, 64
    %v678 = vpop.permute.xlu0 %677
    %v680 = vadd.f32 %v670, %v678
    %v681 = vtanh.pop %v680
    %683 = vrot.lane.b32.xlu0 %v681, 64
    %v684 = vpop.permute.xlu0 %683
    %v686 = vmul.f32 %v665, %v684
    %v688 = vsel %vm229, %v686, 0
    %690 = vmatprep.subr.mxu0 0.0
    %691 = vmatpush1.msra.mxu0 0.0
    %692 = vmatprep.subr.mxu0 0.0
    %693 = vmatpush1.msra.mxu0 0.0
    %694 = vmatprep.subr.mxu0 0.0
    %695 = vmatpush1.msra.mxu0 0.0
    %696 = vmatprep.subr.mxu0 0.0
    %697 = vmatpush1.msra.mxu0 0.0
    %698 = vmatprep.subr.mxu0 0.0
    %699 = vmatpush1.msra.mxu0 0.0
    %700 = vmatprep.subr.mxu0 0.0
    %701 = vmatpush1.msra.mxu0 0.0
    %702 = vmatprep.subr.mxu0 0.0
    %703 = vmatpush1.msra.mxu0 0.0
    %704 = vmatprep.subr.mxu0 0.0
    %705 = vmatpush1.msra.mxu0 0.0
    %706 = vmatprep.subr.mxu0 %v187
    %707 = vmatpush1.msra.mxu0 %v186
    %708 = vmatprep.subr.mxu0 %v185
    %709 = vmatpush1.msra.mxu0 %v184
    %710 = vmatprep.subr.mxu0 %v183
    %711 = vmatpush1.msra.mxu0 %v182
    %712 = vmatprep.subr.mxu0 %v181
    %713 = vmatpush1.msra.mxu0 %v180
    %714 = vmatprep.subr.mxu0 %v179
    %715 = vmatpush1.msra.mxu0 %v178
    %716 = vmatprep.subr.mxu0 %v177
    %717 = vmatpush1.msra.mxu0 %v176
    %718 = vmatprep.subr.mxu0 %v175
    %719 = vmatpush1.msra.mxu0 %v174
    %720 = vmatprep.subr.mxu0 %v173
    %721 = vmatpush1.msra.mxu0 %v172
    %722 = vmatprep.subr.mxu0 0.0
    %723 = vmatpush2.msra.mxu0 0.0
    %724 = vmatprep.subr.mxu0 0.0
    %725 = vmatpush2.msra.mxu0 0.0
    %726 = vmatprep.subr.mxu0 0.0
    %727 = vmatpush2.msra.mxu0 0.0
    %728 = vmatprep.subr.mxu0 0.0
    %729 = vmatpush2.msra.mxu0 0.0
    %730 = vmatprep.subr.mxu0 0.0
    %731 = vmatpush2.msra.mxu0 0.0
    %732 = vmatprep.subr.mxu0 0.0
    %733 = vmatpush2.msra.mxu0 0.0
    %734 = vmatprep.subr.mxu0 0.0
    %735 = vmatpush2.msra.mxu0 0.0
    %736 = vmatprep.subr.mxu0 0.0
    %737 = vmatpush2.msra.mxu0 0.0
    %738 = vmatprep.subr.mxu0 0.0
    %739 = vmatpush2.msra.mxu0 0.0
    %740 = vmatprep.subr.mxu0 0.0
    %741 = vmatpush2.msra.mxu0 0.0
    %742 = vmatprep.subr.mxu0 0.0
    %743 = vmatpush2.msra.mxu0 0.0
    %744 = vmatprep.subr.mxu0 0.0
    %745 = vmatpush2.msra.mxu0 0.0
    %746 = vmatprep.subr.mxu0 0.0
    %747 = vmatpush2.msra.mxu0 0.0
    %748 = vmatprep.subr.mxu0 0.0
    %749 = vmatpush2.msra.mxu0 0.0
    %750 = vmatprep.subr.mxu0 0.0
    %751 = vmatpush2.msra.mxu0 0.0
    %752 = vmatprep.subr.mxu0 0.0
    %753 = vmatpush2.msra.mxu0 0.0
    %754 = vmatprep.mubr.f32.mxu0 0.0
    %755 = vmatmul.mubr.f32.gmra.mxu0 %v688
    %v756 = vpop.f32.mrf.mxu0
    %v757 = vadd.f32 0.0, %v756
    %v758 = vpop.f32.mrf.mxu0
    %v759 = vadd.f32 0.0, %v758
    %760 = vdwg.mxu0
    %v763 = vrot.slane %v757, 6
    %v764 = vrot.slane %v759, 6
    %v767 = vadd.f32 %v168, %v763
    %v768 = vadd.f32 %v170, %v764
    %v769 = vxor.u32 %v767, 2147483648
    %v770 = vxor.u32 %v768, 2147483648
    %v771 = vmul.f32 %v769, 1.442695
    %v772 = vpow.pop %v771
    %v773 = vmul.f32 %v770, 1.442695
    %v774 = vpow.pop %v773
    %v775 = vadd.f32 %v772, 1.0
    %v776 = vadd.f32 %v774, 1.0
    %v777 = vrcp.pop %v775
    %v778 = vmul.f32 1.0, %v777
    %v779 = vrcp.pop %v776
    %v780 = vmul.f32 1.0, %v779
    %v781 = vtanh.pop %v768
    %v783 = vrot.slane %v680, 6
    %v785 = vmul.f32 %v778, %v783
    %787 = vrot.lane.b32.xlu0 %v781, 64
    %v788 = vpop.permute.xlu0 %787
    %v790 = vmul.f32 %v778, %v788
    %792 = vrot.lane.b32.xlu0 %v790, 64
    %v793 = vpop.permute.xlu0 %792
    %v795 = vadd.f32 %v785, %v793
    %v796 = vtanh.pop %v795
    %798 = vrot.lane.b32.xlu0 %v796, 64
    %v799 = vpop.permute.xlu0 %798
    %v801 = vmul.f32 %v780, %v799
    %v803 = vrot.slane %v801, 2
    %v804 = vsel %vm229, %v803, 0
    %806 = vmatprep.subr.mxu0 0.0
    %807 = vmatpush1.msra.mxu0 0.0
    %808 = vmatprep.subr.mxu0 0.0
    %809 = vmatpush1.msra.mxu0 0.0
    %810 = vmatprep.subr.mxu0 0.0
    %811 = vmatpush1.msra.mxu0 0.0
    %812 = vmatprep.subr.mxu0 0.0
    %813 = vmatpush1.msra.mxu0 0.0
    %814 = vmatprep.subr.mxu0 0.0
    %815 = vmatpush1.msra.mxu0 0.0
    %816 = vmatprep.subr.mxu0 0.0
    %817 = vmatpush1.msra.mxu0 0.0
    %818 = vmatprep.subr.mxu0 0.0
    %819 = vmatpush1.msra.mxu0 0.0
    %820 = vmatprep.subr.mxu0 0.0
    %821 = vmatpush1.msra.mxu0 0.0
    %822 = vmatprep.subr.mxu0 %v187
    %823 = vmatpush1.msra.mxu0 %v186
    %824 = vmatprep.subr.mxu0 %v185
    %825 = vmatpush1.msra.mxu0 %v184
    %826 = vmatprep.subr.mxu0 %v183
    %827 = vmatpush1.msra.mxu0 %v182
    %828 = vmatprep.subr.mxu0 %v181
    %829 = vmatpush1.msra.mxu0 %v180
    %830 = vmatprep.subr.mxu0 %v179
    %831 = vmatpush1.msra.mxu0 %v178
    %832 = vmatprep.subr.mxu0 %v177
    %833 = vmatpush1.msra.mxu0 %v176
    %834 = vmatprep.subr.mxu0 %v175
    %835 = vmatpush1.msra.mxu0 %v174
    %836 = vmatprep.subr.mxu0 %v173
    %837 = vmatpush1.msra.mxu0 %v172
    %838 = vmatprep.subr.mxu0 0.0
    %839 = vmatpush2.msra.mxu0 0.0
    %840 = vmatprep.subr.mxu0 0.0
    %841 = vmatpush2.msra.mxu0 0.0
    %842 = vmatprep.subr.mxu0 0.0
    %843 = vmatpush2.msra.mxu0 0.0
    %844 = vmatprep.subr.mxu0 0.0
    %845 = vmatpush2.msra.mxu0 0.0
    %846 = vmatprep.subr.mxu0 0.0
    %847 = vmatpush2.msra.mxu0 0.0
    %848 = vmatprep.subr.mxu0 0.0
    %849 = vmatpush2.msra.mxu0 0.0
    %850 = vmatprep.subr.mxu0 0.0
    %851 = vmatpush2.msra.mxu0 0.0
    %852 = vmatprep.subr.mxu0 0.0
    %853 = vmatpush2.msra.mxu0 0.0
    %854 = vmatprep.subr.mxu0 0.0
    %855 = vmatpush2.msra.mxu0 0.0
    %856 = vmatprep.subr.mxu0 0.0
    %857 = vmatpush2.msra.mxu0 0.0
    %858 = vmatprep.subr.mxu0 0.0
    %859 = vmatpush2.msra.mxu0 0.0
    %860 = vmatprep.subr.mxu0 0.0
    %861 = vmatpush2.msra.mxu0 0.0
    %862 = vmatprep.subr.mxu0 0.0
    %863 = vmatpush2.msra.mxu0 0.0
    %864 = vmatprep.subr.mxu0 0.0
    %865 = vmatpush2.msra.mxu0 0.0
    %866 = vmatprep.subr.mxu0 0.0
    %867 = vmatpush2.msra.mxu0 0.0
    %868 = vmatprep.subr.mxu0 0.0
    %869 = vmatpush2.msra.mxu0 0.0
    %870 = vmatprep.mubr.f32.mxu0 0.0
    %871 = vmatmul.mubr.f32.gmra.mxu0 %v804
    %v872 = vpop.f32.mrf.mxu0
    %v873 = vadd.f32 0.0, %v872
    %v874 = vpop.f32.mrf.mxu0
    %v875 = vadd.f32 0.0, %v874
    %876 = vdwg.mxu0
    %v879 = vrot.slane %v873, 4
    %v880 = vrot.slane %v875, 4
    %v883 = vadd.f32 %v168, %v879
    %v884 = vadd.f32 %v170, %v880
    %v885 = vxor.u32 %v883, 2147483648
    %v886 = vxor.u32 %v884, 2147483648
    %v887 = vmul.f32 %v885, 1.442695
    %v888 = vpow.pop %v887
    %v889 = vmul.f32 %v886, 1.442695
    %v890 = vpow.pop %v889
    %v891 = vadd.f32 %v888, 1.0
    %v892 = vadd.f32 %v890, 1.0
    %v893 = vrcp.pop %v891
    %v894 = vmul.f32 1.0, %v893
    %v895 = vrcp.pop %v892
    %v896 = vmul.f32 1.0, %v895
    %v897 = vtanh.pop %v884
    %v899 = vrot.slane %v795, 6
    %v901 = vmul.f32 %v894, %v899
    %903 = vrot.lane.b32.xlu0 %v897, 64
    %v904 = vpop.permute.xlu0 %903
    %v906 = vmul.f32 %v894, %v904
    %908 = vrot.lane.b32.xlu0 %v906, 64
    %v909 = vpop.permute.xlu0 %908
    %v911 = vadd.f32 %v901, %v909
    %v912 = vtanh.pop %v911
    %914 = vrot.lane.b32.xlu0 %v912, 64
    %v915 = vpop.permute.xlu0 %914
    %v917 = vmul.f32 %v896, %v915
    %v919 = vrot.slane %v917, 4
    %v920 = vsel %vm229, %v919, 0
    %922 = vmatprep.subr.mxu0 0.0
    %923 = vmatpush1.msra.mxu0 0.0
    %924 = vmatprep.subr.mxu0 0.0
    %925 = vmatpush1.msra.mxu0 0.0
    %926 = vmatprep.subr.mxu0 0.0
    %927 = vmatpush1.msra.mxu0 0.0
    %928 = vmatprep.subr.mxu0 0.0
    %929 = vmatpush1.msra.mxu0 0.0
    %930 = vmatprep.subr.mxu0 0.0
    %931 = vmatpush1.msra.mxu0 0.0
    %932 = vmatprep.subr.mxu0 0.0
    %933 = vmatpush1.msra.mxu0 0.0
    %934 = vmatprep.subr.mxu0 0.0
    %935 = vmatpush1.msra.mxu0 0.0
    %936 = vmatprep.subr.mxu0 0.0
    %937 = vmatpush1.msra.mxu0 0.0
    %938 = vmatprep.subr.mxu0 %v187
    %939 = vmatpush1.msra.mxu0 %v186
    %940 = vmatprep.subr.mxu0 %v185
    %941 = vmatpush1.msra.mxu0 %v184
    %942 = vmatprep.subr.mxu0 %v183
    %943 = vmatpush1.msra.mxu0 %v182
    %944 = vmatprep.subr.mxu0 %v181
    %945 = vmatpush1.msra.mxu0 %v180
    %946 = vmatprep.subr.mxu0 %v179
    %947 = vmatpush1.msra.mxu0 %v178
    %948 = vmatprep.subr.mxu0 %v177
    %949 = vmatpush1.msra.mxu0 %v176
    %950 = vmatprep.subr.mxu0 %v175
    %951 = vmatpush1.msra.mxu0 %v174
    %952 = vmatprep.subr.mxu0 %v173
    %953 = vmatpush1.msra.mxu0 %v172
    %954 = vmatprep.subr.mxu0 0.0
    %955 = vmatpush2.msra.mxu0 0.0
    %956 = vmatprep.subr.mxu0 0.0
    %957 = vmatpush2.msra.mxu0 0.0
    %958 = vmatprep.subr.mxu0 0.0
    %959 = vmatpush2.msra.mxu0 0.0
    %960 = vmatprep.subr.mxu0 0.0
    %961 = vmatpush2.msra.mxu0 0.0
    %962 = vmatprep.subr.mxu0 0.0
    %963 = vmatpush2.msra.mxu0 0.0
    %964 = vmatprep.subr.mxu0 0.0
    %965 = vmatpush2.msra.mxu0 0.0
    %966 = vmatprep.subr.mxu0 0.0
    %967 = vmatpush2.msra.mxu0 0.0
    %968 = vmatprep.subr.mxu0 0.0
    %969 = vmatpush2.msra.mxu0 0.0
    %970 = vmatprep.subr.mxu0 0.0
    %971 = vmatpush2.msra.mxu0 0.0
    %972 = vmatprep.subr.mxu0 0.0
    %973 = vmatpush2.msra.mxu0 0.0
    %974 = vmatprep.subr.mxu0 0.0
    %975 = vmatpush2.msra.mxu0 0.0
    %976 = vmatprep.subr.mxu0 0.0
    %977 = vmatpush2.msra.mxu0 0.0
    %978 = vmatprep.subr.mxu0 0.0
    %979 = vmatpush2.msra.mxu0 0.0
    %980 = vmatprep.subr.mxu0 0.0
    %981 = vmatpush2.msra.mxu0 0.0
    %982 = vmatprep.subr.mxu0 0.0
    %983 = vmatpush2.msra.mxu0 0.0
    %984 = vmatprep.subr.mxu0 0.0
    %985 = vmatpush2.msra.mxu0 0.0
    %986 = vmatprep.mubr.f32.mxu0 0.0
    %987 = vmatmul.mubr.f32.gmra.mxu0 %v920
    %v988 = vpop.f32.mrf.mxu0
    %v989 = vadd.f32 0.0, %v988
    %v990 = vpop.f32.mrf.mxu0
    %v991 = vadd.f32 0.0, %v990
    %992 = vdwg.mxu0
    %v995 = vrot.slane %v989, 2
    %v996 = vrot.slane %v991, 2
    %v999 = vadd.f32 %v168, %v995
    %v1000 = vadd.f32 %v170, %v996
    %v1001 = vxor.u32 %v999, 2147483648
    %v1002 = vxor.u32 %v1000, 2147483648
    %v1003 = vmul.f32 %v1001, 1.442695
    %v1004 = vpow.pop %v1003
    %v1005 = vmul.f32 %v1002, 1.442695
    %v1006 = vpow.pop %v1005
    %v1007 = vadd.f32 %v1004, 1.0
    %v1008 = vadd.f32 %v1006, 1.0
    %v1009 = vrcp.pop %v1007
    %v1010 = vmul.f32 1.0, %v1009
    %v1011 = vrcp.pop %v1008
    %v1012 = vmul.f32 1.0, %v1011
    %v1013 = vtanh.pop %v1000
    %v1015 = vrot.slane %v911, 6
    %v1017 = vmul.f32 %v1010, %v1015
    %1019 = vrot.lane.b32.xlu0 %v1013, 64
    %v1020 = vpop.permute.xlu0 %1019
    %v1022 = vmul.f32 %v1010, %v1020
    %1024 = vrot.lane.b32.xlu0 %v1022, 64
    %v1025 = vpop.permute.xlu0 %1024
    %v1027 = vadd.f32 %v1017, %v1025
    %v1028 = vtanh.pop %v1027
    %1030 = vrot.lane.b32.xlu0 %v1028, 64
    %v1031 = vpop.permute.xlu0 %1030
    %v1033 = vmul.f32 %v1012, %v1031
    %v1034 = vld [vmem:[#allocation5] sm:$0xff]
    %v1035 = vld [vmem:[#allocation5 + $0x8] sm:$0xff]
    %v1036 = vld [vmem:[#allocation5 + $0x10] sm:$0xff]
    %v1037 = vld [vmem:[#allocation5 + $0x18] sm:$0xff]
    %v1038 = vld [vmem:[#allocation5 + $0x20] sm:$0xff]
    %v1039 = vld [vmem:[#allocation5 + $0x28] sm:$0xff]
    %v1040 = vld [vmem:[#allocation5 + $0x30] sm:$0xff]
    %v1041 = vld [vmem:[#allocation5 + $0x38] sm:$0xff]
    %v1042 = vld [vmem:[%s5] sm:$0x1]
    %v1044 = vlaneseq
    %v1045 = vshrl.u32 %v1044, 7
    %v1046 = vsub.s32 0, %v1045
    %v1047 = vrot.slane %v1042, %v1046
    %v1050 = vrot.slane %v1033, 6
    %v1051 = vsel %vm229, %v1050, 0
    %1053 = vmatprep.subr.mxu0 0.0
    %1054 = vmatpush1.msra.mxu0 0.0
    %1055 = vmatprep.subr.mxu0 0.0
    %1056 = vmatpush1.msra.mxu0 0.0
    %1057 = vmatprep.subr.mxu0 0.0
    %1058 = vmatpush1.msra.mxu0 0.0
    %1059 = vmatprep.subr.mxu0 0.0
    %1060 = vmatpush1.msra.mxu0 0.0
    %1061 = vmatprep.subr.mxu0 0.0
    %1062 = vmatpush1.msra.mxu0 0.0
    %1063 = vmatprep.subr.mxu0 0.0
    %1064 = vmatpush1.msra.mxu0 0.0
    %1065 = vmatprep.subr.mxu0 0.0
    %1066 = vmatpush1.msra.mxu0 0.0
    %1067 = vmatprep.subr.mxu0 0.0
    %1068 = vmatpush1.msra.mxu0 0.0
    %1069 = vmatprep.subr.mxu0 0.0
    %1070 = vmatpush1.msra.mxu0 %v1041
    %1071 = vmatprep.subr.mxu0 0.0
    %1072 = vmatpush1.msra.mxu0 %v1040
    %1073 = vmatprep.subr.mxu0 0.0
    %1074 = vmatpush1.msra.mxu0 %v1039
    %1075 = vmatprep.subr.mxu0 0.0
    %1076 = vmatpush1.msra.mxu0 %v1038
    %1077 = vmatprep.subr.mxu0 0.0
    %1078 = vmatpush1.msra.mxu0 %v1037
    %1079 = vmatprep.subr.mxu0 0.0
    %1080 = vmatpush1.msra.mxu0 %v1036
    %1081 = vmatprep.subr.mxu0 0.0
    %1082 = vmatpush1.msra.mxu0 %v1035
    %1083 = vmatprep.subr.mxu0 0.0
    %1084 = vmatpush1.msra.mxu0 %v1034
    %1085 = vmatprep.subr.mxu0 0.0
    %1086 = vmatpush2.msra.mxu0 0.0
    %1087 = vmatprep.subr.mxu0 0.0
    %1088 = vmatpush2.msra.mxu0 0.0
    %1089 = vmatprep.subr.mxu0 0.0
    %1090 = vmatpush2.msra.mxu0 0.0
    %1091 = vmatprep.subr.mxu0 0.0
    %1092 = vmatpush2.msra.mxu0 0.0
    %1093 = vmatprep.subr.mxu0 0.0
    %1094 = vmatpush2.msra.mxu0 0.0
    %1095 = vmatprep.subr.mxu0 0.0
    %1096 = vmatpush2.msra.mxu0 0.0
    %1097 = vmatprep.subr.mxu0 0.0
    %1098 = vmatpush2.msra.mxu0 0.0
    %1099 = vmatprep.subr.mxu0 0.0
    %1100 = vmatpush2.msra.mxu0 0.0
    %1101 = vmatprep.subr.mxu0 0.0
    %1102 = vmatpush2.msra.mxu0 0.0
    %1103 = vmatprep.subr.mxu0 0.0
    %1104 = vmatpush2.msra.mxu0 0.0
    %1105 = vmatprep.subr.mxu0 0.0
    %1106 = vmatpush2.msra.mxu0 0.0
    %1107 = vmatprep.subr.mxu0 0.0
    %1108 = vmatpush2.msra.mxu0 0.0
    %1109 = vmatprep.subr.mxu0 0.0
    %1110 = vmatpush2.msra.mxu0 0.0
    %1111 = vmatprep.subr.mxu0 0.0
    %1112 = vmatpush2.msra.mxu0 0.0
    %1113 = vmatprep.subr.mxu0 0.0
    %1114 = vmatpush2.msra.mxu0 0.0
    %1115 = vmatprep.subr.mxu0 0.0
    %1116 = vmatpush2.msra.mxu0 0.0
    %1117 = vmatprep.mubr.f32.mxu0 0.0
    %1118 = vmatmul.mubr.f32.gmra.mxu0 %v1051
    %v1119 = vpop.f32.mrf.mxu0
    %v1120 = vadd.f32 %v1047, %v1119
    %v1121 = vpop.f32.mrf.mxu0
    %1122 = vdwg.mxu0
    %v1123 = vxor.u32 %v1120, 2147483648
    %v1124 = vmul.f32 %v1123, 1.442695
    %v1125 = vpow.pop %v1124
    %v1126 = vadd.f32 %v1125, 1.0
    %v1127 = vrcp.pop %v1126
    %v1128 = vmul.f32 1.0, %v1127
    %v1129 = vtanh.pop %v1120
    %v1131 = vrot.slane %v1027, 6
    %1132 = vrot.lane.b32.xlu0 %v1131, 64
    %v1133 = vpop.permute.xlu0 %1132
    %v1135 = vmul.f32 %v1128, %v1133
    %1137 = vrot.lane.b32.xlu0 %v1129, 32
    %v1138 = vpop.permute.xlu0 %1137
    %v1140 = vmul.f32 %v1128, %v1138
    %1142 = vrot.lane.b32.xlu0 %v1140, 32
    %v1143 = vpop.permute.xlu0 %1142
    %v1145 = vadd.f32 %v1135, %v1143
    %v1146 = vtanh.pop %v1145
    %1148 = vrot.lane.b32.xlu0 %v1146, 32
    %v1149 = vpop.permute.xlu0 %1148
    %v1151 = vmul.f32 %v1128, %v1149
    %v1154 = vunpack.c.l.s4 1966171168
    %v1155 = vunpack.c.0.s8 %v1154
    %v1156 = vlaneseq
    %v1157 = vshrl.u32 %v1156, 7
    %v1158 = vsub.s32 %v1155, %v1157
    %v1159 = vrot.slane %v1151, %v1158
    %v1160 = vcombine.high %v1159, %v1159
    %v1162 = vunpack.c.l.s4 1966171168
    %v1163 = vunpack.c.0.s8 %v1162
    %v1164 = vlaneseq
    %v1165 = vshrl.u32 %v1164, 7
    %v1166 = vsub.s32 %v1163, %v1165
    %v1167 = vrot.slane %v1159, %v1166
    %v1169 = vunpack.c.l.s4 1966171168
    %v1170 = vunpack.c.0.s8 %v1169
    %v1171 = vlaneseq
    %v1172 = vshrl.u32 %v1171, 7
    %v1173 = vsub.s32 %v1170, %v1172
    %v1174 = vrot.slane %v1160, %v1173
    %v1177 = vld [vmem:[%s6] sm:$0x1]
    %1179 = vrot.lane.b32.xlu0 %v1177, 64
    %v1180 = vpop.permute.xlu0 %1179
    %v1182 = vmul.f32 %v1167, %v1180
    %v1183 = vmul.f32 %v1174, %v1180
    %v1186 = vlaneseq
    %v1187 = vshrl.u32 %v1186, 7
    %v1188 = vsub.s32 0, %v1187
    %v1189 = vrot.slane %v1182, %v1188
    %v1190 = vlaneseq
    %v1191 = vshrl.u32 %v1190, 7
    %v1192 = vsub.s32 0, %v1191
    %v1193 = vrot.slane %v1183, %v1192
    %1194 = vrot.lane.b32.xlu0 %v1189, 64
    %v1195 = vpop.permute.xlu0 %1194
    %1196 = vrot.lane.b32.xlu0 %v1193, 64
    %v1197 = vpop.permute.xlu0 %1196
    %vm1200 = vcmask 253952
    %v1201 = vsel %vm1200, %v1195, 0.0
    %1202 = vadd.xlane.f32.xlu0 %v1201
    %v1203 = vpop.xlane.xlu0 %1202
    %v1204 = vsel %vm1200, %v1197, 0.0
    %1205 = vadd.xlane.f32.xlu0 %v1204
    %v1206 = vpop.xlane.xlu0 %1205
    %v1207 = vld [vmem:[#allocation2] sm:$0x1]
    %v1209 = vlaneseq
    %v1210 = vshrl.u32 %v1209, 7
    %v1211 = vsub.s32 0, %v1210
    %v1212 = vrot.slane %v1207, %v1211
    %1214 = vbcast.lane.b32.xlu0 %v1212, 256
    %v1215 = vpop.permute.xlu0 %1214
    %v1217 = vadd.f32 %v1203, %v1215
    %v1218 = vadd.f32 %v1206, %v1215
    %v1221 = vrot.slane %v1218, 7
    %vm1222 = vcmask 1041409
    %v1223 = vsel %vm1222, %v1221, %v1217
    %vm1225 = vcmask 1024
    %1226 = vst.msk [vmem:[%s8] sm:$0x3] %vm1225, %v1223
    // Predicated region
    $region42: #{tpu_custom_call.1} parent=1 // pred_check
      _
    $region43: #{tpu_custom_call.1} parent=1 // pred_check_branch
      %1228 = sbr.rel (0) target = $region45
    $region44: #{tpu_custom_call.1} parent=1 // pred_region
      _
    $region45: #{tpu_custom_call.1} parent=1 // pred_fallthru
      _
    // Predicated region
    $region46: #{tpu_custom_call.1} parent=1 // pred_check
      _
    $region47: #{tpu_custom_call.1} parent=1 // pred_check_branch
      %1230 = sbr.rel (0) target = $region49
    $region48: #{tpu_custom_call.1} parent=1 // pred_region
      _
    $region49: #{tpu_custom_call.1} parent=1 // pred_fallthru
      _
    %1231 = vsyncpa [#allocation4], 1
    %1232 = vsyncpa [#allocation6], 1

</llo_original>
